<compile_context>
chip_gen: v7x
topology: tpu7x:2x2x1
jax: 0.10.0
libtpu: 0.0.40
codegen_flags: <defaults>
</compile_context>

<pallas_src>
import jax
import jax.numpy as jnp
from jax import lax
from jax.experimental import pallas as pl
from jax.experimental.pallas import tpu as pltpu

# ---------------------------- problem constants -----------------------------
B = 2                          # batch
C_IN = 8                       # in_planes
C_OUT = 8                      # out_planes (== in_planes for depthwise dynamic-scale)
H = W = 16                     # spatial
HW = H * W
K = 4                          # number of dynamic-weight candidates
TEMPERATURE = 34.0             # maker temperature (34 % 3 == 1)
HIDDEN = int(C_IN * 0.5) + 1   # maker hidden planes = int(in_planes * ratio) + 1
DILATIONS = (1, 3, 5)          # cfg.dynamic_scale.base
KS = 3                         # dynamic-scale kernel size
MAX_SHIFT = max(DILATIONS) * W + max(DILATIONS)   # max |dh*W + dw| over all taps (= 85)
HALO = 128                     # lane-aligned flat halo (>= MAX_SHIFT, multiple of 128)
BC = B * C_OUT                 # stacked batch*channel rows

assert C_OUT == C_IN           # groups == in_planes => pure depthwise dynamic_scale
assert HALO >= MAX_SHIFT and HALO % 128 == 0 and HW % 128 == 0
# TODO(synk): the general grouped case (out_planes = m * in_planes, m > 1) for
# the dynamic-scale branch is not implemented; channel multiplier 1 assumed.


# --------------------------- fused dsc kernel -------------------------------
def _dsc_fused_kernel(x_ref, wbd_ref, bdw_ref, wds_ref, bds_ref, o_ref, ypad_ref):
    # x_ref   : VMEM (B*Cin,  H*W)          input, batch/channel stacked, lane-dense
    # wbd_ref : VMEM (B*Cout, B*Cin)        block-diagonal aggregated 1x1 weights
    # bdw_ref : VMEM (B*Cout, 1)            aggregated dynamic-weight bias
    # wds_ref : VMEM (B*Cout, 9)            depthwise 3x3 taps (tiled over batch)
    # bds_ref : VMEM (B*Cout, 1)            depthwise bias (tiled over batch)
    # o_ref   : VMEM (B*Cout, H*W)          output, lane-dense
    # ypad_ref: VMEM (B*Cout, H*W + 2*HALO) scratch: y with lane-aligned zero halos

    # ---- dynamic-weight 1x1 conv: one MXU push + bias broadcast -----------
    y = jnp.dot(wbd_ref[...], x_ref[...], preferred_element_type=jnp.float32)
    y = y + bdw_ref[...]                                    # (BC, HW)

    # ---- stage y into the zero-haloed flat scratch (all stores 128-aligned)
    ypad_ref[:, :HALO] = jnp.zeros((BC, HALO), jnp.float32)
    ypad_ref[:, HALO + HW:] = jnp.zeros((BC, HALO), jnp.float32)
    ypad_ref[:, HALO:HALO + HW] = y

    # Lane coordinate within an image row, for the W-edge validity masks.
    # (H-edge taps either land in the zero halo or are also W-invalid, so only
    #  the W mask is needed — hoisted once, reused across all taps.)
    w_idx = lax.broadcasted_iota(jnp.int32, (1, HW), 1) % W
    w_masks = {}
    for d in DILATIONS:
        for dw in (-d, d):
            w_masks[dw] = (w_idx + dw >= 0) & (w_idx + dw < W)

    wds = wds_ref[...]                                      # (BC, 9)
    bds = bds_ref[...]                                      # (BC, 1)

    # ---- dynamic-scale: depthwise 3x3 for each dilation, SiLU-summed ------
    out = jnp.zeros((BC, HW), jnp.float32)
    for d in DILATIONS:
        acc = jnp.zeros((BC, HW), jnp.float32)
        for kw in range(KS):                                # column-major: one mask / column
            dw = (kw - 1) * d
            col = jnp.zeros((BC, HW), jnp.float32)
            for kh in range(KS):
                dh = (kh - 1) * d
                start = HALO + dh * W + dw                  # static slice offset
                win = ypad_ref[:, start:start + HW]         # shifted (BC, HW) load
                t = kh * KS + kw
                col = col + win * wds[:, t:t + 1]           # (BC,1) tap broadcast
            if dw != 0:                                     # mask W-edge row wrap once
                col = jnp.where(w_masks[dw], col, 0.0)
            acc = acc + col
        conv = acc + bds
        out = out + conv * jax.nn.sigmoid(conv)             # SiLU (EUP)
    o_ref[...] = out.astype(o_ref.dtype)


# ----------------------------- maker (gating MLP) ---------------------------
# Tiny gating network (global avg-pool -> 1x1 conv -> relu -> 1x1 conv ->
# softmax/T); O(B*K) work, kept as plain XLA glue (sublane-wise softmax of a
# (B, K) tensor has no clean/cheap in-kernel layout at this size).
def maker_attention(x, fc1_w, fc1_b, fc2_w, fc2_b):
    pooled = jnp.mean(x, axis=(2, 3))                       # AdaptiveAvgPool2d(1)
    h = jax.nn.relu(pooled @ fc1_w.T + fc1_b)               # (B, HIDDEN)
    logits = h @ fc2_w.T + fc2_b                            # (B, K)
    return jax.nn.softmax(logits / TEMPERATURE, axis=1)


# ------------------------------- dsc forward --------------------------------
def dsc_forward(x, params):
    # ---- maker + weight aggregation: tiny XLA glue -------------------------
    att = maker_attention(x, params['fc1_w'], params['fc1_b'],
                          params['fc2_w'], params['fc2_b'])          # (B, K)
    agg_w = (att @ params['w_dw'].reshape(K, -1)).reshape(B, C_OUT, C_IN)
    agg_b = att @ params['b_dw']                                     # (B, Cout)

    # Block-diagonal (B*Cout, B*Cin) weight: all samples in one MXU push.
    eye = jnp.eye(B, dtype=jnp.float32)
    w_bd = (agg_w[:, :, None, :] * eye[:, None, :, None]).reshape(B * C_OUT, B * C_IN)

    x_flat = x.reshape(B * C_IN, HW)                                 # lane-dense input
    bdw = agg_b.reshape(B * C_OUT, 1)
    wds = jnp.tile(params['w_ds'].reshape(C_OUT, KS * KS), (B, 1))   # (B*Cout, 9)
    bds = jnp.tile(params['b_ds'].reshape(C_OUT, 1), (B, 1))         # (B*Cout, 1)

    out_flat = pl.pallas_call(
        _dsc_fused_kernel,
        out_shape=jax.ShapeDtypeStruct((B * C_OUT, HW), jnp.float32),
        in_specs=[pl.BlockSpec(memory_space=pltpu.MemorySpace.VMEM)] * 5,
        out_specs=pl.BlockSpec(memory_space=pltpu.MemorySpace.VMEM),
        scratch_shapes=[pltpu.VMEM((B * C_OUT, HW + 2 * HALO), jnp.float32)],
    )(x_flat, w_bd, bdw, wds, bds)
    return out_flat.reshape(B, C_OUT, H, W)


# --------------------------- plain-JAX reference ----------------------------
def dsc_reference(x, params):
    att = maker_attention(x, params['fc1_w'], params['fc1_b'],
                          params['fc2_w'], params['fc2_b'])
    agg_w = (att @ params['w_dw'].reshape(K, -1)).reshape(B, C_OUT, C_IN)
    agg_b = att @ params['b_dw']                                     # (B, Cout)
    y = jnp.einsum('boi,bihw->bohw', agg_w, x) + agg_b[:, :, None, None]
    out = jnp.zeros((B, C_OUT, H, W), jnp.float32)
    for d in DILATIONS:
        conv = lax.conv_general_dilated(
            y, params['w_ds'], window_strides=(1, 1),
            padding=((d, d), (d, d)), rhs_dilation=(d, d),
            dimension_numbers=('NCHW', 'OIHW', 'NCHW'),
            feature_group_count=C_IN)
        conv = conv + params['b_ds'][None, :, None, None]
        out = out + jax.nn.silu(conv)
    return out


# ----------------------------------- main ------------------------------------
if __name__ == "__main__":
    key = jax.random.PRNGKey(0)
    ks = jax.random.split(key, 7)
    params = {
        # maker: fc1 (HIDDEN, C_IN, 1, 1) conv stored squeezed, fc2 (K, HIDDEN, 1, 1)
        'fc1_w': jax.random.normal(ks[0], (HIDDEN, C_IN), jnp.float32) * 0.5,
        'fc1_b': jnp.zeros((HIDDEN,), jnp.float32),
        'fc2_w': jax.random.normal(ks[1], (K, HIDDEN), jnp.float32) * 0.5,
        'fc2_b': jnp.zeros((K,), jnp.float32),
        # dw_conv2d: weight (K, out, in, 1, 1), bias (K, out)
        'w_dw': jax.random.normal(ks[2], (K, C_IN, C_IN, 1, 1), jnp.float32) * 0.3,
        'b_dw': jax.random.normal(ks[3], (K, C_IN), jnp.float32) * 0.1,
        # ds_conv2d: depthwise weight (out, in//groups=1, 3, 3), bias (out,)
        'w_ds': jax.random.normal(ks[4], (C_OUT, 1, KS, KS), jnp.float32) * 0.3,
        'b_ds': jax.random.normal(ks[5], (C_OUT,), jnp.float32) * 0.1,
    }
    x = jax.random.normal(ks[6], (B, C_IN, H, W), dtype=jnp.float32)

    out = jax.jit(dsc_forward)(x, params)
    out = jax.block_until_ready(out)

    ref = dsc_reference(x, params)
    assert out.shape == (B, C_OUT, H, W)
    assert jnp.allclose(out, ref, atol=2e-3, rtol=2e-3), "Pallas output mismatch vs reference"

    print("KERNEL_OK")
</pallas_src>

<mosaic_0001>
module attributes {stable_mosaic.version = 11 : i64} {
  func.func @_dsc_fused_kernel(%arg0: memref<16x256xf32, #tpu.memory_space<vmem>>, %arg1: memref<16x16xf32, #tpu.memory_space<vmem>>, %arg2: memref<16x1xf32, #tpu.memory_space<vmem>>, %arg3: memref<16x9xf32, #tpu.memory_space<vmem>>, %arg4: memref<16x1xf32, #tpu.memory_space<vmem>>, %arg5: memref<16x256xf32, #tpu.memory_space<vmem>>, %arg6: memref<16x512xf32, #tpu.memory_space<vmem>>) attributes {dimension_semantics = [], scalar_prefetch = 0 : i64, scratch_operands = 1 : i64, tpu.core_type = #tpu.core_type<tc>} {
    %c0 = arith.constant 0 : index
    %c0_0 = arith.constant 0 : index
    %0 = vector.load %arg1[%c0, %c0_0] : memref<16x16xf32, #tpu.memory_space<vmem>>, vector<16x16xf32>
    %c0_1 = arith.constant 0 : index
    %c0_2 = arith.constant 0 : index
    %1 = vector.load %arg0[%c0_1, %c0_2] : memref<16x256xf32, #tpu.memory_space<vmem>>, vector<16x256xf32>
    %cst = arith.constant dense<0.000000e+00> : vector<16x256xf32>
    %2 = tpu.matmul %0, %1, %cst {dimension_numbers = #tpu.dot_dimension_numbers<[1], [0], [0], [1], [0, 0, 1, 1], [], []>} : vector<16x16xf32>, vector<16x256xf32>, vector<16x256xf32> -> vector<16x256xf32>
    %c0_3 = arith.constant 0 : index
    %c0_4 = arith.constant 0 : index
    %3 = vector.load %arg2[%c0_3, %c0_4] : memref<16x1xf32, #tpu.memory_space<vmem>>, vector<16x1xf32>
    %4 = vector.broadcast %3 : vector<16x1xf32> to vector<16x256xf32>
    %5 = arith.addf %2, %4 : vector<16x256xf32>
    %cst_5 = arith.constant 0.000000e+00 : f32
    %6 = vector.broadcast %cst_5 : f32 to vector<16x128xf32>
    %c0_6 = arith.constant 0 : index
    %c0_7 = arith.constant 0 : index
    %7 = vector.load %arg6[%c0_6, %c0_7] : memref<16x512xf32, #tpu.memory_space<vmem>>, vector<16x128xf32>
    tpu.vector_store %arg6[%c0_6, %c0_7], %6 {strides = array<i32>} : memref<16x512xf32, #tpu.memory_space<vmem>>, vector<16x128xf32>,
    %cst_8 = arith.constant 0.000000e+00 : f32
    %8 = vector.broadcast %cst_8 : f32 to vector<16x128xf32>
    %c0_9 = arith.constant 0 : index
    %c384 = arith.constant 384 : index
    %9 = vector.load %arg6[%c0_9, %c384] : memref<16x512xf32, #tpu.memory_space<vmem>>, vector<16x128xf32>
    tpu.vector_store %arg6[%c0_9, %c384], %8 {strides = array<i32>} : memref<16x512xf32, #tpu.memory_space<vmem>>, vector<16x128xf32>,
    %c0_10 = arith.constant 0 : index
    %c128 = arith.constant 128 : index
    %10 = vector.load %arg6[%c0_10, %c128] : memref<16x512xf32, #tpu.memory_space<vmem>>, vector<16x256xf32>
    tpu.vector_store %arg6[%c0_10, %c128], %5 {strides = array<i32>} : memref<16x512xf32, #tpu.memory_space<vmem>>, vector<16x256xf32>,
    %11 = tpu.iota {dimensions = array<i32: 1>} : vector<1x256xi32>
    %c16_i32 = arith.constant 16 : i32
    %c0_i32 = arith.constant 0 : i32
    %12 = arith.cmpi eq, %c16_i32, %c0_i32 : i32
    %c1_i32 = arith.constant 1 : i32
    %13 = arith.select %12, %c1_i32, %c16_i32 : i32
    %14 = vector.broadcast %13 : i32 to vector<1x256xi32>
    %15 = arith.remsi %11, %14 : vector<1x256xi32>
    %c0_i32_11 = arith.constant 0 : i32
    %16 = vector.broadcast %c0_i32_11 : i32 to vector<1x256xi32>
    %17 = arith.cmpi ne, %15, %16 : vector<1x256xi32>
    %c0_i32_12 = arith.constant 0 : i32
    %18 = vector.broadcast %c0_i32_12 : i32 to vector<1x256xi32>
    %19 = arith.cmpi slt, %15, %18 : vector<1x256xi32>
    %c0_i32_13 = arith.constant 0 : i32
    %20 = arith.cmpi slt, %13, %c0_i32_13 : i32
    %21 = vector.broadcast %20 : i1 to vector<1x256xi1>
    %22 = vector.broadcast %21 : vector<1x256xi1> to vector<1x256xi1>
    %23 = arith.xori %19, %22 : vector<1x256xi1>
    %24 = arith.andi %23, %17 : vector<1x256xi1>
    %25 = vector.broadcast %13 : i32 to vector<1x256xi32>
    %26 = arith.addi %15, %25 : vector<1x256xi32>
    %27 = arith.select %24, %26, %15 : vector<1x256xi1>, vector<1x256xi32>
    %c-1_i32 = arith.constant -1 : i32
    %28 = vector.broadcast %c-1_i32 : i32 to vector<1x256xi32>
    %29 = arith.addi %27, %28 : vector<1x256xi32>
    %c0_i32_14 = arith.constant 0 : i32
    %30 = vector.broadcast %c0_i32_14 : i32 to vector<1x256xi32>
    %31 = arith.cmpi sge, %29, %30 : vector<1x256xi32>
    %c-1_i32_15 = arith.constant -1 : i32
    %32 = vector.broadcast %c-1_i32_15 : i32 to vector<1x256xi32>
    %33 = arith.addi %27, %32 : vector<1x256xi32>
    %c16_i32_16 = arith.constant 16 : i32
    %34 = vector.broadcast %c16_i32_16 : i32 to vector<1x256xi32>
    %35 = arith.cmpi slt, %33, %34 : vector<1x256xi32>
    %36 = arith.andi %31, %35 : vector<1x256xi1>
    %c1_i32_17 = arith.constant 1 : i32
    %37 = vector.broadcast %c1_i32_17 : i32 to vector<1x256xi32>
    %38 = arith.addi %27, %37 : vector<1x256xi32>
    %c0_i32_18 = arith.constant 0 : i32
    %39 = vector.broadcast %c0_i32_18 : i32 to vector<1x256xi32>
    %40 = arith.cmpi sge, %38, %39 : vector<1x256xi32>
    %c1_i32_19 = arith.constant 1 : i32
    %41 = vector.broadcast %c1_i32_19 : i32 to vector<1x256xi32>
    %42 = arith.addi %27, %41 : vector<1x256xi32>
    %c16_i32_20 = arith.constant 16 : i32
    %43 = vector.broadcast %c16_i32_20 : i32 to vector<1x256xi32>
    %44 = arith.cmpi slt, %42, %43 : vector<1x256xi32>
    %45 = arith.andi %40, %44 : vector<1x256xi1>
    %c-3_i32 = arith.constant -3 : i32
    %46 = vector.broadcast %c-3_i32 : i32 to vector<1x256xi32>
    %47 = arith.addi %27, %46 : vector<1x256xi32>
    %c0_i32_21 = arith.constant 0 : i32
    %48 = vector.broadcast %c0_i32_21 : i32 to vector<1x256xi32>
    %49 = arith.cmpi sge, %47, %48 : vector<1x256xi32>
    %c-3_i32_22 = arith.constant -3 : i32
    %50 = vector.broadcast %c-3_i32_22 : i32 to vector<1x256xi32>
    %51 = arith.addi %27, %50 : vector<1x256xi32>
    %c16_i32_23 = arith.constant 16 : i32
    %52 = vector.broadcast %c16_i32_23 : i32 to vector<1x256xi32>
    %53 = arith.cmpi slt, %51, %52 : vector<1x256xi32>
    %54 = arith.andi %49, %53 : vector<1x256xi1>
    %c3_i32 = arith.constant 3 : i32
    %55 = vector.broadcast %c3_i32 : i32 to vector<1x256xi32>
    %56 = arith.addi %27, %55 : vector<1x256xi32>
    %c0_i32_24 = arith.constant 0 : i32
    %57 = vector.broadcast %c0_i32_24 : i32 to vector<1x256xi32>
    %58 = arith.cmpi sge, %56, %57 : vector<1x256xi32>
    %c3_i32_25 = arith.constant 3 : i32
    %59 = vector.broadcast %c3_i32_25 : i32 to vector<1x256xi32>
    %60 = arith.addi %27, %59 : vector<1x256xi32>
    %c16_i32_26 = arith.constant 16 : i32
    %61 = vector.broadcast %c16_i32_26 : i32 to vector<1x256xi32>
    %62 = arith.cmpi slt, %60, %61 : vector<1x256xi32>
    %63 = arith.andi %58, %62 : vector<1x256xi1>
    %c-5_i32 = arith.constant -5 : i32
    %64 = vector.broadcast %c-5_i32 : i32 to vector<1x256xi32>
    %65 = arith.addi %27, %64 : vector<1x256xi32>
    %c0_i32_27 = arith.constant 0 : i32
    %66 = vector.broadcast %c0_i32_27 : i32 to vector<1x256xi32>
    %67 = arith.cmpi sge, %65, %66 : vector<1x256xi32>
    %c-5_i32_28 = arith.constant -5 : i32
    %68 = vector.broadcast %c-5_i32_28 : i32 to vector<1x256xi32>
    %69 = arith.addi %27, %68 : vector<1x256xi32>
    %c16_i32_29 = arith.constant 16 : i32
    %70 = vector.broadcast %c16_i32_29 : i32 to vector<1x256xi32>
    %71 = arith.cmpi slt, %69, %70 : vector<1x256xi32>
    %72 = arith.andi %67, %71 : vector<1x256xi1>
    %c5_i32 = arith.constant 5 : i32
    %73 = vector.broadcast %c5_i32 : i32 to vector<1x256xi32>
    %74 = arith.addi %27, %73 : vector<1x256xi32>
    %c0_i32_30 = arith.constant 0 : i32
    %75 = vector.broadcast %c0_i32_30 : i32 to vector<1x256xi32>
    %76 = arith.cmpi sge, %74, %75 : vector<1x256xi32>
    %c5_i32_31 = arith.constant 5 : i32
    %77 = vector.broadcast %c5_i32_31 : i32 to vector<1x256xi32>
    %78 = arith.addi %27, %77 : vector<1x256xi32>
    %c16_i32_32 = arith.constant 16 : i32
    %79 = vector.broadcast %c16_i32_32 : i32 to vector<1x256xi32>
    %80 = arith.cmpi slt, %78, %79 : vector<1x256xi32>
    %81 = arith.andi %76, %80 : vector<1x256xi1>
    %c0_33 = arith.constant 0 : index
    %c0_34 = arith.constant 0 : index
    %82 = vector.load %arg3[%c0_33, %c0_34] : memref<16x9xf32, #tpu.memory_space<vmem>>, vector<16x9xf32>
    %c0_35 = arith.constant 0 : index
    %c0_36 = arith.constant 0 : index
    %83 = vector.load %arg4[%c0_35, %c0_36] : memref<16x1xf32, #tpu.memory_space<vmem>>, vector<16x1xf32>
    %cst_37 = arith.constant 0.000000e+00 : f32
    %84 = vector.broadcast %cst_37 : f32 to vector<16x256xf32>
    %cst_38 = arith.constant 0.000000e+00 : f32
    %85 = vector.broadcast %cst_38 : f32 to vector<16x256xf32>
    %cst_39 = arith.constant 0.000000e+00 : f32
    %86 = vector.broadcast %cst_39 : f32 to vector<16x256xf32>
    %c0_40 = arith.constant 0 : index
    %c111 = arith.constant 111 : index
    %87 = vector.load %arg6[%c0_40, %c111] : memref<16x512xf32, #tpu.memory_space<vmem>>, vector<16x256xf32>
    %88 = vector.extract_strided_slice %82 {offsets = [0, 0], sizes = [16, 1], strides = [1, 1]} : vector<16x9xf32> to vector<16x1xf32>
    %89 = vector.broadcast %88 : vector<16x1xf32> to vector<16x256xf32>
    %90 = arith.mulf %87, %89 : vector<16x256xf32>
    %91 = arith.addf %86, %90 : vector<16x256xf32>
    %c0_41 = arith.constant 0 : index
    %c127 = arith.constant 127 : index
    %92 = vector.load %arg6[%c0_41, %c127] : memref<16x512xf32, #tpu.memory_space<vmem>>, vector<16x256xf32>
    %93 = vector.extract_strided_slice %82 {offsets = [0, 3], sizes = [16, 1], strides = [1, 1]} : vector<16x9xf32> to vector<16x1xf32>
    %94 = vector.broadcast %93 : vector<16x1xf32> to vector<16x256xf32>
    %95 = arith.mulf %92, %94 : vector<16x256xf32>
    %96 = arith.addf %91, %95 : vector<16x256xf32>
    %c0_42 = arith.constant 0 : index
    %c143 = arith.constant 143 : index
    %97 = vector.load %arg6[%c0_42, %c143] : memref<16x512xf32, #tpu.memory_space<vmem>>, vector<16x256xf32>
    %98 = vector.extract_strided_slice %82 {offsets = [0, 6], sizes = [16, 1], strides = [1, 1]} : vector<16x9xf32> to vector<16x1xf32>
    %99 = vector.broadcast %98 : vector<16x1xf32> to vector<16x256xf32>
    %100 = arith.mulf %97, %99 : vector<16x256xf32>
    %101 = arith.addf %96, %100 : vector<16x256xf32>
    %cst_43 = arith.constant 0.000000e+00 : f32
    %102 = vector.shape_cast %36 : vector<1x256xi1> to vector<1x256xi1>
    %103 = vector.broadcast %102 : vector<1x256xi1> to vector<16x256xi1>
    %104 = vector.broadcast %cst_43 : f32 to vector<16x256xf32>
    %105 = arith.select %103, %101, %104 : vector<16x256xi1>, vector<16x256xf32>
    %106 = arith.addf %85, %105 : vector<16x256xf32>
    %cst_44 = arith.constant 0.000000e+00 : f32
    %107 = vector.broadcast %cst_44 : f32 to vector<16x256xf32>
    %c0_45 = arith.constant 0 : index
    %c112 = arith.constant 112 : index
    %108 = vector.load %arg6[%c0_45, %c112] : memref<16x512xf32, #tpu.memory_space<vmem>>, vector<16x256xf32>
    %109 = vector.extract_strided_slice %82 {offsets = [0, 1], sizes = [16, 1], strides = [1, 1]} : vector<16x9xf32> to vector<16x1xf32>
    %110 = vector.broadcast %109 : vector<16x1xf32> to vector<16x256xf32>
    %111 = arith.mulf %108, %110 : vector<16x256xf32>
    %112 = arith.addf %107, %111 : vector<16x256xf32>
    %c0_46 = arith.constant 0 : index
    %c128_47 = arith.constant 128 : index
    %113 = vector.load %arg6[%c0_46, %c128_47] : memref<16x512xf32, #tpu.memory_space<vmem>>, vector<16x256xf32>
    %114 = vector.extract_strided_slice %82 {offsets = [0, 4], sizes = [16, 1], strides = [1, 1]} : vector<16x9xf32> to vector<16x1xf32>
    %115 = vector.broadcast %114 : vector<16x1xf32> to vector<16x256xf32>
    %116 = arith.mulf %113, %115 : vector<16x256xf32>
    %117 = arith.addf %112, %116 : vector<16x256xf32>
    %c0_48 = arith.constant 0 : index
    %c144 = arith.constant 144 : index
    %118 = vector.load %arg6[%c0_48, %c144] : memref<16x512xf32, #tpu.memory_space<vmem>>, vector<16x256xf32>
    %119 = vector.extract_strided_slice %82 {offsets = [0, 7], sizes = [16, 1], strides = [1, 1]} : vector<16x9xf32> to vector<16x1xf32>
    %120 = vector.broadcast %119 : vector<16x1xf32> to vector<16x256xf32>
    %121 = arith.mulf %118, %120 : vector<16x256xf32>
    %122 = arith.addf %117, %121 : vector<16x256xf32>
    %123 = arith.addf %106, %122 : vector<16x256xf32>
    %cst_49 = arith.constant 0.000000e+00 : f32
    %124 = vector.broadcast %cst_49 : f32 to vector<16x256xf32>
    %c0_50 = arith.constant 0 : index
    %c113 = arith.constant 113 : index
    %125 = vector.load %arg6[%c0_50, %c113] : memref<16x512xf32, #tpu.memory_space<vmem>>, vector<16x256xf32>
    %126 = vector.extract_strided_slice %82 {offsets = [0, 2], sizes = [16, 1], strides = [1, 1]} : vector<16x9xf32> to vector<16x1xf32>
    %127 = vector.broadcast %126 : vector<16x1xf32> to vector<16x256xf32>
    %128 = arith.mulf %125, %127 : vector<16x256xf32>
    %129 = arith.addf %124, %128 : vector<16x256xf32>
    %c0_51 = arith.constant 0 : index
    %c129 = arith.constant 129 : index
    %130 = vector.load %arg6[%c0_51, %c129] : memref<16x512xf32, #tpu.memory_space<vmem>>, vector<16x256xf32>
    %131 = vector.extract_strided_slice %82 {offsets = [0, 5], sizes = [16, 1], strides = [1, 1]} : vector<16x9xf32> to vector<16x1xf32>
    %132 = vector.broadcast %131 : vector<16x1xf32> to vector<16x256xf32>
    %133 = arith.mulf %130, %132 : vector<16x256xf32>
    %134 = arith.addf %129, %133 : vector<16x256xf32>
    %c0_52 = arith.constant 0 : index
    %c145 = arith.constant 145 : index
    %135 = vector.load %arg6[%c0_52, %c145] : memref<16x512xf32, #tpu.memory_space<vmem>>, vector<16x256xf32>
    %136 = vector.extract_strided_slice %82 {offsets = [0, 8], sizes = [16, 1], strides = [1, 1]} : vector<16x9xf32> to vector<16x1xf32>
    %137 = vector.broadcast %136 : vector<16x1xf32> to vector<16x256xf32>
    %138 = arith.mulf %135, %137 : vector<16x256xf32>
    %139 = arith.addf %134, %138 : vector<16x256xf32>
    %cst_53 = arith.constant 0.000000e+00 : f32
    %140 = vector.shape_cast %45 : vector<1x256xi1> to vector<1x256xi1>
    %141 = vector.broadcast %140 : vector<1x256xi1> to vector<16x256xi1>
    %142 = vector.broadcast %cst_53 : f32 to vector<16x256xf32>
    %143 = arith.select %141, %139, %142 : vector<16x256xi1>, vector<16x256xf32>
    %144 = arith.addf %123, %143 : vector<16x256xf32>
    %145 = vector.broadcast %83 : vector<16x1xf32> to vector<16x256xf32>
    %146 = arith.addf %144, %145 : vector<16x256xf32>
    %147 = arith.negf %146 : vector<16x256xf32>
    %148 = math.exp %147 : vector<16x256xf32>
    %cst_54 = arith.constant 1.000000e+00 : f32
    %149 = vector.broadcast %cst_54 : f32 to vector<16x256xf32>
    %150 = arith.addf %149, %148 : vector<16x256xf32>
    %151 = arith.divf %149, %150 : vector<16x256xf32>
    %152 = arith.mulf %146, %151 : vector<16x256xf32>
    %153 = arith.addf %84, %152 : vector<16x256xf32>
    %cst_55 = arith.constant 0.000000e+00 : f32
    %154 = vector.broadcast %cst_55 : f32 to vector<16x256xf32>
    %cst_56 = arith.constant 0.000000e+00 : f32
    %155 = vector.broadcast %cst_56 : f32 to vector<16x256xf32>
    %c0_57 = arith.constant 0 : index
    %c77 = arith.constant 77 : index
    %156 = vector.load %arg6[%c0_57, %c77] : memref<16x512xf32, #tpu.memory_space<vmem>>, vector<16x256xf32>
    %157 = vector.extract_strided_slice %82 {offsets = [0, 0], sizes = [16, 1], strides = [1, 1]} : vector<16x9xf32> to vector<16x1xf32>
    %158 = vector.broadcast %157 : vector<16x1xf32> to vector<16x256xf32>
    %159 = arith.mulf %156, %158 : vector<16x256xf32>
    %160 = arith.addf %155, %159 : vector<16x256xf32>
    %c0_58 = arith.constant 0 : index
    %c125 = arith.constant 125 : index
    %161 = vector.load %arg6[%c0_58, %c125] : memref<16x512xf32, #tpu.memory_space<vmem>>, vector<16x256xf32>
    %162 = vector.extract_strided_slice %82 {offsets = [0, 3], sizes = [16, 1], strides = [1, 1]} : vector<16x9xf32> to vector<16x1xf32>
    %163 = vector.broadcast %162 : vector<16x1xf32> to vector<16x256xf32>
    %164 = arith.mulf %161, %163 : vector<16x256xf32>
    %165 = arith.addf %160, %164 : vector<16x256xf32>
    %c0_59 = arith.constant 0 : index
    %c173 = arith.constant 173 : index
    %166 = vector.load %arg6[%c0_59, %c173] : memref<16x512xf32, #tpu.memory_space<vmem>>, vector<16x256xf32>
    %167 = vector.extract_strided_slice %82 {offsets = [0, 6], sizes = [16, 1], strides = [1, 1]} : vector<16x9xf32> to vector<16x1xf32>
    %168 = vector.broadcast %167 : vector<16x1xf32> to vector<16x256xf32>
    %169 = arith.mulf %166, %168 : vector<16x256xf32>
    %170 = arith.addf %165, %169 : vector<16x256xf32>
    %cst_60 = arith.constant 0.000000e+00 : f32
    %171 = vector.shape_cast %54 : vector<1x256xi1> to vector<1x256xi1>
    %172 = vector.broadcast %171 : vector<1x256xi1> to vector<16x256xi1>
    %173 = vector.broadcast %cst_60 : f32 to vector<16x256xf32>
    %174 = arith.select %172, %170, %173 : vector<16x256xi1>, vector<16x256xf32>
    %175 = arith.addf %154, %174 : vector<16x256xf32>
    %cst_61 = arith.constant 0.000000e+00 : f32
    %176 = vector.broadcast %cst_61 : f32 to vector<16x256xf32>
    %c0_62 = arith.constant 0 : index
    %c80 = arith.constant 80 : index
    %177 = vector.load %arg6[%c0_62, %c80] : memref<16x512xf32, #tpu.memory_space<vmem>>, vector<16x256xf32>
    %178 = vector.extract_strided_slice %82 {offsets = [0, 1], sizes = [16, 1], strides = [1, 1]} : vector<16x9xf32> to vector<16x1xf32>
    %179 = vector.broadcast %178 : vector<16x1xf32> to vector<16x256xf32>
    %180 = arith.mulf %177, %179 : vector<16x256xf32>
    %181 = arith.addf %176, %180 : vector<16x256xf32>
    %c0_63 = arith.constant 0 : index
    %c128_64 = arith.constant 128 : index
    %182 = vector.load %arg6[%c0_63, %c128_64] : memref<16x512xf32, #tpu.memory_space<vmem>>, vector<16x256xf32>
    %183 = vector.extract_strided_slice %82 {offsets = [0, 4], sizes = [16, 1], strides = [1, 1]} : vector<16x9xf32> to vector<16x1xf32>
    %184 = vector.broadcast %183 : vector<16x1xf32> to vector<16x256xf32>
    %185 = arith.mulf %182, %184 : vector<16x256xf32>
    %186 = arith.addf %181, %185 : vector<16x256xf32>
    %c0_65 = arith.constant 0 : index
    %c176 = arith.constant 176 : index
    %187 = vector.load %arg6[%c0_65, %c176] : memref<16x512xf32, #tpu.memory_space<vmem>>, vector<16x256xf32>
    %188 = vector.extract_strided_slice %82 {offsets = [0, 7], sizes = [16, 1], strides = [1, 1]} : vector<16x9xf32> to vector<16x1xf32>
    %189 = vector.broadcast %188 : vector<16x1xf32> to vector<16x256xf32>
    %190 = arith.mulf %187, %189 : vector<16x256xf32>
    %191 = arith.addf %186, %190 : vector<16x256xf32>
    %192 = arith.addf %175, %191 : vector<16x256xf32>
    %cst_66 = arith.constant 0.000000e+00 : f32
    %193 = vector.broadcast %cst_66 : f32 to vector<16x256xf32>
    %c0_67 = arith.constant 0 : index
    %c83 = arith.constant 83 : index
    %194 = vector.load %arg6[%c0_67, %c83] : memref<16x512xf32, #tpu.memory_space<vmem>>, vector<16x256xf32>
    %195 = vector.extract_strided_slice %82 {offsets = [0, 2], sizes = [16, 1], strides = [1, 1]} : vector<16x9xf32> to vector<16x1xf32>
    %196 = vector.broadcast %195 : vector<16x1xf32> to vector<16x256xf32>
    %197 = arith.mulf %194, %196 : vector<16x256xf32>
    %198 = arith.addf %193, %197 : vector<16x256xf32>
    %c0_68 = arith.constant 0 : index
    %c131 = arith.constant 131 : index
    %199 = vector.load %arg6[%c0_68, %c131] : memref<16x512xf32, #tpu.memory_space<vmem>>, vector<16x256xf32>
    %200 = vector.extract_strided_slice %82 {offsets = [0, 5], sizes = [16, 1], strides = [1, 1]} : vector<16x9xf32> to vector<16x1xf32>
    %201 = vector.broadcast %200 : vector<16x1xf32> to vector<16x256xf32>
    %202 = arith.mulf %199, %201 : vector<16x256xf32>
    %203 = arith.addf %198, %202 : vector<16x256xf32>
    %c0_69 = arith.constant 0 : index
    %c179 = arith.constant 179 : index
    %204 = vector.load %arg6[%c0_69, %c179] : memref<16x512xf32, #tpu.memory_space<vmem>>, vector<16x256xf32>
    %205 = vector.extract_strided_slice %82 {offsets = [0, 8], sizes = [16, 1], strides = [1, 1]} : vector<16x9xf32> to vector<16x1xf32>
    %206 = vector.broadcast %205 : vector<16x1xf32> to vector<16x256xf32>
    %207 = arith.mulf %204, %206 : vector<16x256xf32>
    %208 = arith.addf %203, %207 : vector<16x256xf32>
    %cst_70 = arith.constant 0.000000e+00 : f32
    %209 = vector.shape_cast %63 : vector<1x256xi1> to vector<1x256xi1>
    %210 = vector.broadcast %209 : vector<1x256xi1> to vector<16x256xi1>
    %211 = vector.broadcast %cst_70 : f32 to vector<16x256xf32>
    %212 = arith.select %210, %208, %211 : vector<16x256xi1>, vector<16x256xf32>
    %213 = arith.addf %192, %212 : vector<16x256xf32>
    %214 = vector.broadcast %83 : vector<16x1xf32> to vector<16x256xf32>
    %215 = arith.addf %213, %214 : vector<16x256xf32>
    %216 = arith.negf %215 : vector<16x256xf32>
    %217 = math.exp %216 : vector<16x256xf32>
    %cst_71 = arith.constant 1.000000e+00 : f32
    %218 = vector.broadcast %cst_71 : f32 to vector<16x256xf32>
    %219 = arith.addf %218, %217 : vector<16x256xf32>
    %220 = arith.divf %218, %219 : vector<16x256xf32>
    %221 = arith.mulf %215, %220 : vector<16x256xf32>
    %222 = arith.addf %153, %221 : vector<16x256xf32>
    %cst_72 = arith.constant 0.000000e+00 : f32
    %223 = vector.broadcast %cst_72 : f32 to vector<16x256xf32>
    %cst_73 = arith.constant 0.000000e+00 : f32
    %224 = vector.broadcast %cst_73 : f32 to vector<16x256xf32>
    %c0_74 = arith.constant 0 : index
    %c43 = arith.constant 43 : index
    %225 = vector.load %arg6[%c0_74, %c43] : memref<16x512xf32, #tpu.memory_space<vmem>>, vector<16x256xf32>
    %226 = vector.extract_strided_slice %82 {offsets = [0, 0], sizes = [16, 1], strides = [1, 1]} : vector<16x9xf32> to vector<16x1xf32>
    %227 = vector.broadcast %226 : vector<16x1xf32> to vector<16x256xf32>
    %228 = arith.mulf %225, %227 : vector<16x256xf32>
    %229 = arith.addf %224, %228 : vector<16x256xf32>
    %c0_75 = arith.constant 0 : index
    %c123 = arith.constant 123 : index
    %230 = vector.load %arg6[%c0_75, %c123] : memref<16x512xf32, #tpu.memory_space<vmem>>, vector<16x256xf32>
    %231 = vector.extract_strided_slice %82 {offsets = [0, 3], sizes = [16, 1], strides = [1, 1]} : vector<16x9xf32> to vector<16x1xf32>
    %232 = vector.broadcast %231 : vector<16x1xf32> to vector<16x256xf32>
    %233 = arith.mulf %230, %232 : vector<16x256xf32>
    %234 = arith.addf %229, %233 : vector<16x256xf32>
    %c0_76 = arith.constant 0 : index
    %c203 = arith.constant 203 : index
    %235 = vector.load %arg6[%c0_76, %c203] : memref<16x512xf32, #tpu.memory_space<vmem>>, vector<16x256xf32>
    %236 = vector.extract_strided_slice %82 {offsets = [0, 6], sizes = [16, 1], strides = [1, 1]} : vector<16x9xf32> to vector<16x1xf32>
    %237 = vector.broadcast %236 : vector<16x1xf32> to vector<16x256xf32>
    %238 = arith.mulf %235, %237 : vector<16x256xf32>
    %239 = arith.addf %234, %238 : vector<16x256xf32>
    %cst_77 = arith.constant 0.000000e+00 : f32
    %240 = vector.shape_cast %72 : vector<1x256xi1> to vector<1x256xi1>
    %241 = vector.broadcast %240 : vector<1x256xi1> to vector<16x256xi1>
    %242 = vector.broadcast %cst_77 : f32 to vector<16x256xf32>
    %243 = arith.select %241, %239, %242 : vector<16x256xi1>, vector<16x256xf32>
    %244 = arith.addf %223, %243 : vector<16x256xf32>
    %cst_78 = arith.constant 0.000000e+00 : f32
    %245 = vector.broadcast %cst_78 : f32 to vector<16x256xf32>
    %c0_79 = arith.constant 0 : index
    %c48 = arith.constant 48 : index
    %246 = vector.load %arg6[%c0_79, %c48] : memref<16x512xf32, #tpu.memory_space<vmem>>, vector<16x256xf32>
    %247 = vector.extract_strided_slice %82 {offsets = [0, 1], sizes = [16, 1], strides = [1, 1]} : vector<16x9xf32> to vector<16x1xf32>
    %248 = vector.broadcast %247 : vector<16x1xf32> to vector<16x256xf32>
    %249 = arith.mulf %246, %248 : vector<16x256xf32>
    %250 = arith.addf %245, %249 : vector<16x256xf32>
    %c0_80 = arith.constant 0 : index
    %c128_81 = arith.constant 128 : index
    %251 = vector.load %arg6[%c0_80, %c128_81] : memref<16x512xf32, #tpu.memory_space<vmem>>, vector<16x256xf32>
    %252 = vector.extract_strided_slice %82 {offsets = [0, 4], sizes = [16, 1], strides = [1, 1]} : vector<16x9xf32> to vector<16x1xf32>
    %253 = vector.broadcast %252 : vector<16x1xf32> to vector<16x256xf32>
    %254 = arith.mulf %251, %253 : vector<16x256xf32>
    %255 = arith.addf %250, %254 : vector<16x256xf32>
    %c0_82 = arith.constant 0 : index
    %c208 = arith.constant 208 : index
    %256 = vector.load %arg6[%c0_82, %c208] : memref<16x512xf32, #tpu.memory_space<vmem>>, vector<16x256xf32>
    %257 = vector.extract_strided_slice %82 {offsets = [0, 7], sizes = [16, 1], strides = [1, 1]} : vector<16x9xf32> to vector<16x1xf32>
    %258 = vector.broadcast %257 : vector<16x1xf32> to vector<16x256xf32>
    %259 = arith.mulf %256, %258 : vector<16x256xf32>
    %260 = arith.addf %255, %259 : vector<16x256xf32>
    %261 = arith.addf %244, %260 : vector<16x256xf32>
    %cst_83 = arith.constant 0.000000e+00 : f32
    %262 = vector.broadcast %cst_83 : f32 to vector<16x256xf32>
    %c0_84 = arith.constant 0 : index
    %c53 = arith.constant 53 : index
    %263 = vector.load %arg6[%c0_84, %c53] : memref<16x512xf32, #tpu.memory_space<vmem>>, vector<16x256xf32>
    %264 = vector.extract_strided_slice %82 {offsets = [0, 2], sizes = [16, 1], strides = [1, 1]} : vector<16x9xf32> to vector<16x1xf32>
    %265 = vector.broadcast %264 : vector<16x1xf32> to vector<16x256xf32>
    %266 = arith.mulf %263, %265 : vector<16x256xf32>
    %267 = arith.addf %262, %266 : vector<16x256xf32>
    %c0_85 = arith.constant 0 : index
    %c133 = arith.constant 133 : index
    %268 = vector.load %arg6[%c0_85, %c133] : memref<16x512xf32, #tpu.memory_space<vmem>>, vector<16x256xf32>
    %269 = vector.extract_strided_slice %82 {offsets = [0, 5], sizes = [16, 1], strides = [1, 1]} : vector<16x9xf32> to vector<16x1xf32>
    %270 = vector.broadcast %269 : vector<16x1xf32> to vector<16x256xf32>
    %271 = arith.mulf %268, %270 : vector<16x256xf32>
    %272 = arith.addf %267, %271 : vector<16x256xf32>
    %c0_86 = arith.constant 0 : index
    %c213 = arith.constant 213 : index
    %273 = vector.load %arg6[%c0_86, %c213] : memref<16x512xf32, #tpu.memory_space<vmem>>, vector<16x256xf32>
    %274 = vector.extract_strided_slice %82 {offsets = [0, 8], sizes = [16, 1], strides = [1, 1]} : vector<16x9xf32> to vector<16x1xf32>
    %275 = vector.broadcast %274 : vector<16x1xf32> to vector<16x256xf32>
    %276 = arith.mulf %273, %275 : vector<16x256xf32>
    %277 = arith.addf %272, %276 : vector<16x256xf32>
    %cst_87 = arith.constant 0.000000e+00 : f32
    %278 = vector.shape_cast %81 : vector<1x256xi1> to vector<1x256xi1>
    %279 = vector.broadcast %278 : vector<1x256xi1> to vector<16x256xi1>
    %280 = vector.broadcast %cst_87 : f32 to vector<16x256xf32>
    %281 = arith.select %279, %277, %280 : vector<16x256xi1>, vector<16x256xf32>
    %282 = arith.addf %261, %281 : vector<16x256xf32>
    %283 = vector.broadcast %83 : vector<16x1xf32> to vector<16x256xf32>
    %284 = arith.addf %282, %283 : vector<16x256xf32>
    %285 = arith.negf %284 : vector<16x256xf32>
    %286 = math.exp %285 : vector<16x256xf32>
    %cst_88 = arith.constant 1.000000e+00 : f32
    %287 = vector.broadcast %cst_88 : f32 to vector<16x256xf32>
    %288 = arith.addf %287, %286 : vector<16x256xf32>
    %289 = arith.divf %287, %288 : vector<16x256xf32>
    %290 = arith.mulf %284, %289 : vector<16x256xf32>
    %291 = arith.addf %222, %290 : vector<16x256xf32>
    %c0_89 = arith.constant 0 : index
    %c0_90 = arith.constant 0 : index
    %292 = vector.load %arg5[%c0_89, %c0_90] : memref<16x256xf32, #tpu.memory_space<vmem>>, vector<16x256xf32>
    tpu.vector_store %arg5[%c0_89, %c0_90], %291 {strides = array<i32>} : memref<16x256xf32, #tpu.memory_space<vmem>>, vector<16x256xf32>,
    return
  }
}

</mosaic_0001>

<llo_original>
// kernel: dsc_forward.1
$region0: #{dsc_forward.1}
  #allocation0 [shape = 'u32[]', space=smem, size = 0x4, offset = 0x4, fixed_abs, tag = 'smem constant byte address 0x4 - core index']
  #allocation1 [shape = 'u32[144,128]{1,0:T(1,128)}', space=vmem, size = 0x12000, scoped, tag = 'internal scratch']
  #allocation2 [shape = 'f32[16,512]{1,0:T(8,128)}', space=vmem, size = 0x8000, scoped, tag = 'scratch operand']
  %s0 = inlined_call_operand.vmem [shape: f32[16,256], index: 0, kind: input, shape index: {}]
  %s1 = inlined_call_operand.vmem [shape: f32[16,16], index: 1, kind: input, shape index: {}]
  %s2 = inlined_call_operand.vmem [shape: f32[16,1], index: 2, kind: input, shape index: {}]
  %s3 = inlined_call_operand.vmem [shape: f32[16,9], index: 3, kind: input, shape index: {}]
  %s4 = inlined_call_operand.vmem [shape: f32[16,1], index: 4, kind: input, shape index: {}]
  %s5 = inlined_call_operand.vmem [shape: f32[16,256], index: 5, kind: output, shape index: {}]
  %s6 = sld [smem:[#allocation0]]
  $region30: #{dsc_forward.1} parent=0
    _
  %s8 = ssub.s32 1, %s6
  %s9 = scalar_select 0, %s8, %s6
  // Predicated region
  $region2: #{dsc_forward.1} parent=0 // pred_check
    _
  $region3: #{dsc_forward.1} parent=0 // pred_check_branch
    %11 = sbr.rel (0) target = $region5
  $region4: #{dsc_forward.1} parent=0 // pred_region
    _
  $region5: #{dsc_forward.1} parent=0 // pred_fallthru
    _
  // Predicated region
  $region6: #{dsc_forward.1} parent=0 // pred_check
    _
  $region7: #{dsc_forward.1} parent=0 // pred_check_branch
    %13 = sbr.rel (0) target = $region9
  $region8: #{dsc_forward.1} parent=0 // pred_region
    _
  $region9: #{dsc_forward.1} parent=0 // pred_fallthru
    _
  // Predicated region
  $region10: #{dsc_forward.1} parent=0 // pred_check
    _
  $region11: #{dsc_forward.1} parent=0 // pred_check_branch
    %15 = sbr.rel (0) target = $region13
  $region12: #{dsc_forward.1} parent=0 // pred_region
    _
  $region13: #{dsc_forward.1} parent=0 // pred_fallthru
    _
  // Predicated region
  $region14: #{dsc_forward.1} parent=0 // pred_check
    _
  $region15: #{dsc_forward.1} parent=0 // pred_check_branch
    %17 = sbr.rel (0) target = $region17
  $region16: #{dsc_forward.1} parent=0 // pred_region
    _
  $region17: #{dsc_forward.1} parent=0 // pred_fallthru
    _
  // Predicated region
  $region18: #{dsc_forward.1} parent=0 // pred_check
    _
  $region19: #{dsc_forward.1} parent=0 // pred_check_branch
    %19 = sbr.rel (0) target = $region21
  $region20: #{dsc_forward.1} parent=0 // pred_region
    _
  $region21: #{dsc_forward.1} parent=0 // pred_fallthru
    _
  %v20 = vld [vmem:[%s1] sm:$0xff]
  %v21 = vld [vmem:[%s1 + $0x8] sm:$0xff]
  %v22 = vld [vmem:[%s0] sm:$0xff]
  %v23 = vld [vmem:[%s0 + $0x8] sm:$0xff]
  %v24 = vld [vmem:[%s0 + $0x10] sm:$0xff]
  %v25 = vld [vmem:[%s0 + $0x18] sm:$0xff]
  %v26 = vld [vmem:[%s2] sm:$0xff]
  %v27 = vld [vmem:[%s2 + $0x8] sm:$0xff]
  %29 = vset.pattern.permute.xlu0 0
  %30 = vperm.xlu0 %29, %v26
  %v31 = vpop.permute.xlu0 %30
  %34 = vset.pattern.permute.xlu0 0
  %35 = vperm.xlu0 %34, %v27
  %v36 = vpop.permute.xlu0 %35
  %vm38 = vcmask 130048
  %v40 = vsel %vm38, %v20, 0
  %v43 = vsel %vm38, %v21, 0
  %45 = vmatprep.subr.mxu0 %v23
  %46 = vmatpush1.msra.mxu0 %v22
  %47 = vmatprep.subr.mxu0 %v25
  %48 = vmatpush1.msra.mxu0 %v24
  %49 = vmatprep.subr.mxu0 0.0
  %50 = vmatpush1.msra.mxu0 0.0
  %51 = vmatprep.subr.mxu0 0.0
  %52 = vmatpush1.msra.mxu0 0.0
  %53 = vmatprep.subr.mxu0 0.0
  %54 = vmatpush1.msra.mxu0 0.0
  %55 = vmatprep.subr.mxu0 0.0
  %56 = vmatpush1.msra.mxu0 0.0
  %57 = vmatprep.subr.mxu0 0.0
  %58 = vmatpush1.msra.mxu0 0.0
  %59 = vmatprep.subr.mxu0 0.0
  %60 = vmatpush1.msra.mxu0 0.0
  %61 = vmatprep.subr.mxu0 0.0
  %62 = vmatpush1.msra.mxu0 0.0
  %63 = vmatprep.subr.mxu0 0.0
  %64 = vmatpush1.msra.mxu0 0.0
  %65 = vmatprep.subr.mxu0 0.0
  %66 = vmatpush1.msra.mxu0 0.0
  %67 = vmatprep.subr.mxu0 0.0
  %68 = vmatpush1.msra.mxu0 0.0
  %69 = vmatprep.subr.mxu0 0.0
  %70 = vmatpush1.msra.mxu0 0.0
  %71 = vmatprep.subr.mxu0 0.0
  %72 = vmatpush1.msra.mxu0 0.0
  %73 = vmatprep.subr.mxu0 0.0
  %74 = vmatpush1.msra.mxu0 0.0
  %75 = vmatprep.subr.mxu0 0.0
  %76 = vmatpush1.msra.mxu0 0.0
  %77 = vmatprep.subr.mxu0 0.0
  %78 = vmatpush1.msra.mxu0 0.0
  %79 = vmatprep.subr.mxu0 0.0
  %80 = vmatpush1.msra.mxu0 0.0
  %81 = vmatprep.subr.mxu0 0.0
  %82 = vmatpush1.msra.mxu0 0.0
  %83 = vmatprep.subr.mxu0 0.0
  %84 = vmatpush1.msra.mxu0 0.0
  %85 = vmatprep.subr.mxu0 0.0
  %86 = vmatpush1.msra.mxu0 0.0
  %87 = vmatprep.subr.mxu0 0.0
  %88 = vmatpush1.msra.mxu0 0.0
  %89 = vmatprep.subr.mxu0 0.0
  %90 = vmatpush1.msra.mxu0 0.0
  %91 = vmatprep.subr.mxu0 0.0
  %92 = vmatpush1.msra.mxu0 0.0
  %93 = vmatprep.subr.mxu0 0.0
  %94 = vmatpush1.msra.mxu0 0.0
  %95 = vmatprep.subr.mxu0 0.0
  %96 = vmatpush1.msra.mxu0 0.0
  %97 = vmatprep.subr.mxu0 0.0
  %98 = vmatpush1.msra.mxu0 0.0
  %99 = vmatprep.subr.mxu0 0.0
  %100 = vmatpush1.msra.mxu0 0.0
  %101 = vmatprep.subr.mxu0 0.0
  %102 = vmatpush1.msra.mxu0 0.0
  %103 = vmatprep.subr.mxu0 0.0
  %104 = vmatpush1.msra.mxu0 0.0
  %105 = vmatprep.subr.mxu0 0.0
  %106 = vmatpush1.msra.mxu0 0.0
  %107 = vmatprep.subr.mxu0 0.0
  %108 = vmatpush1.msra.mxu0 0.0
  %109 = vmatprep.mubr.f32.mxu0 0.0
  %110 = vmatmul.mubr.f32.gmra.mrb[0].mxu0 %v40
  %v111 = vpop.f32.mrb[0].mxu0
  %v112 = vadd.f32 %v31, %v111
  %v113 = vpop.f32.mrb[0].mxu0
  %v114 = vadd.f32 %v31, %v113
  %115 = vmatprep.mubr.f32.mxu0 0.0
  %116 = vmatmul.mubr.f32.gmra.mrb[0].mxu0 %v43
  %v117 = vpop.f32.mrb[0].mxu0
  %v118 = vadd.f32 %v36, %v117
  %v119 = vpop.f32.mrb[0].mxu0
  %v120 = vadd.f32 %v36, %v119
  %121 = vdwg.mxu0
  %122 = vst [vmem:[#allocation2] sm:$0xff] 0.0
  %123 = vst [vmem:[#allocation2 + $0x20] sm:$0xff] 0.0
  %124 = vst [vmem:[#allocation2 + $0x18] sm:$0xff] 0.0
  %125 = vst [vmem:[#allocation2 + $0x38] sm:$0xff] 0.0
  %126 = vst [vmem:[#allocation2 + $0x8] sm:$0xff] %v112
  %127 = vst [vmem:[#allocation2 + $0x10] sm:$0xff] %v114
  %128 = vst [vmem:[#allocation2 + $0x28] sm:$0xff] %v118
  %129 = vst [vmem:[#allocation2 + $0x30] sm:$0xff] %v120
  %v130 = vlaneseq
  %v131 = vand.u32 %v130, 127
  %v132 = vadd.s32 %v131, 128
  %vm133 = vcmp.lt.s32.totalorder %v131, 0
  %v134 = vsub.s32 0, %v131
  %v135 = vsel %vm133, %v134, %v131
  %v136 = vshrl.u32 %v135, 4
  %v137 = vand.u32 %v135, 15
  %v138 = vsub.s32 0, %v137
  %v139 = vsel %vm133, %v138, %v137
  %vm140 = vcmp.lt.s32.totalorder %v132, 0
  %v141 = vsub.s32 0, %v132
  %v142 = vsel %vm140, %v141, %v132
  %v143 = vshrl.u32 %v142, 4
  %v144 = vand.u32 %v142, 15
  %v145 = vsub.s32 0, %v144
  %v146 = vsel %vm140, %v145, %v144
  %vm147 = vcmp.ne.s32.totalorder %v139, 0
  %vm148 = vcmp.ne.s32.totalorder %v146, 0
  %vm149 = vcmp.lt.s32.totalorder %v139, 0
  %vm150 = vcmp.lt.s32.totalorder %v146, 0
  %vm151 = vmand %vm149, %vm147
  %vm152 = vmand %vm150, %vm148
  %v153 = vadd.s32 %v139, 16
  %v154 = vadd.s32 %v146, 16
  %v155 = vsel %vm151, %v153, %v139
  %v156 = vsel %vm152, %v154, %v146
  %v157 = vadd.s32 %v155, 4294967295
  %v158 = vadd.s32 %v156, 4294967295
  %vm159 = vcmp.ge.s32.totalorder %v157, 0
  %vm160 = vcmp.ge.s32.totalorder %v158, 0
  %vm161 = vcmp.lt.s32.totalorder %v157, 16
  %vm162 = vcmp.lt.s32.totalorder %v158, 16
  %vm163 = vmand %vm159, %vm161
  %vm164 = vmand %vm160, %vm162
  %v165 = vadd.s32 %v155, 1
  %v166 = vadd.s32 %v156, 1
  %vm167 = vcmp.ge.s32.totalorder %v165, 0
  %vm168 = vcmp.ge.s32.totalorder %v166, 0
  %vm169 = vcmp.lt.s32.totalorder %v165, 16
  %vm170 = vcmp.lt.s32.totalorder %v166, 16
  %vm171 = vmand %vm167, %vm169
  %vm172 = vmand %vm168, %vm170
  %v173 = vadd.s32 %v155, 4294967293
  %v174 = vadd.s32 %v156, 4294967293
  %vm175 = vcmp.ge.s32.totalorder %v173, 0
  %vm176 = vcmp.ge.s32.totalorder %v174, 0
  %vm177 = vcmp.lt.s32.totalorder %v173, 16
  %vm178 = vcmp.lt.s32.totalorder %v174, 16
  %vm179 = vmand %vm175, %vm177
  %vm180 = vmand %vm176, %vm178
  %v181 = vadd.s32 %v155, 3
  %v182 = vadd.s32 %v156, 3
  %vm183 = vcmp.ge.s32.totalorder %v181, 0
  %vm184 = vcmp.ge.s32.totalorder %v182, 0
  %vm185 = vcmp.lt.s32.totalorder %v181, 16
  %vm186 = vcmp.lt.s32.totalorder %v182, 16
  %vm187 = vmand %vm183, %vm185
  %vm188 = vmand %vm184, %vm186
  %v189 = vadd.s32 %v155, 4294967291
  %v190 = vadd.s32 %v156, 4294967291
  %vm191 = vcmp.ge.s32.totalorder %v189, 0
  %vm192 = vcmp.ge.s32.totalorder %v190, 0
  %vm193 = vcmp.lt.s32.totalorder %v189, 16
  %vm194 = vcmp.lt.s32.totalorder %v190, 16
  %vm195 = vmand %vm191, %vm193
  %vm196 = vmand %vm192, %vm194
  %v197 = vadd.s32 %v155, 5
  %v198 = vadd.s32 %v156, 5
  %vm199 = vcmp.ge.s32.totalorder %v197, 0
  %vm200 = vcmp.ge.s32.totalorder %v198, 0
  %vm201 = vcmp.lt.s32.totalorder %v197, 16
  %vm202 = vcmp.lt.s32.totalorder %v198, 16
  %vm203 = vmand %vm199, %vm201
  %vm204 = vmand %vm200, %vm202
  %v205 = vld [vmem:[%s3] sm:$0xff]
  %v206 = vld [vmem:[%s3 + $0x8] sm:$0xff]
  %v207 = vld [vmem:[%s4] sm:$0xff]
  %v208 = vld [vmem:[%s4 + $0x8] sm:$0xff]
  %v209 = vld [vmem:[#allocation2] sm:$0xff]
  %v210 = vld [vmem:[#allocation2 + $0x8] sm:$0xff]
  %v211 = vld [vmem:[#allocation2 + $0x10] sm:$0xff]
  %v212 = vld [vmem:[#allocation2 + $0x20] sm:$0xff]
  %v213 = vld [vmem:[#allocation2 + $0x28] sm:$0xff]
  %v214 = vld [vmem:[#allocation2 + $0x30] sm:$0xff]
  %216 = vset.pattern.permute.xlu0 0
  %217 = vperm.xlu0 %216, %v205
  %v218 = vpop.permute.xlu0 %217
  %221 = vset.pattern.permute.xlu0 0
  %222 = vperm.xlu0 %221, %v206
  %v223 = vpop.permute.xlu0 %222
  %v225 = vmul.f32 %v209, %v218
  %v226 = vmul.f32 %v210, %v218
  %v227 = vmul.f32 %v211, %v218
  %v228 = vmul.f32 %v212, %v223
  %v229 = vmul.f32 %v213, %v223
  %v230 = vmul.f32 %v214, %v223
  %v231 = vadd.f32 %v225, 0.0
  %v232 = vadd.f32 %v226, 0.0
  %v233 = vadd.f32 %v227, 0.0
  %v234 = vadd.f32 %v228, 0.0
  %v235 = vadd.f32 %v229, 0.0
  %v236 = vadd.f32 %v230, 0.0
  %237 = vset.pattern.permute.xlu0 3
  %238 = vperm.xlu0 %237, %v205
  %v239 = vpop.permute.xlu0 %238
  %241 = vset.pattern.permute.xlu0 3
  %242 = vperm.xlu0 %241, %v206
  %v243 = vpop.permute.xlu0 %242
  %v245 = vmul.f32 %v209, %v239
  %v246 = vmul.f32 %v210, %v239
  %v247 = vmul.f32 %v211, %v239
  %v248 = vmul.f32 %v212, %v243
  %v249 = vmul.f32 %v213, %v243
  %v250 = vmul.f32 %v214, %v243
  %257 = vrot.lane.b32.xlu0 %v245, 112
  %v258 = vpop.permute.xlu0 %257
  %259 = vrot.lane.b32.xlu0 %v246, 112
  %v260 = vpop.permute.xlu0 %259
  %261 = vrot.lane.b32.xlu0 %v247, 112
  %v262 = vpop.permute.xlu0 %261
  %263 = vrot.lane.b32.xlu0 %v248, 112
  %v264 = vpop.permute.xlu0 %263
  %265 = vrot.lane.b32.xlu0 %v249, 112
  %v266 = vpop.permute.xlu0 %265
  %267 = vrot.lane.b32.xlu0 %v250, 112
  %v268 = vpop.permute.xlu0 %267
  %vm269 = vcmask 916480
  %v270 = vsel %vm269, %v258, %v260
  %v271 = vsel %vm269, %v260, %v262
  %v272 = vsel %vm269, %v264, %v266
  %v273 = vsel %vm269, %v266, %v268
  %v280 = vadd.f32 %v231, %v270
  %v281 = vadd.f32 %v232, %v271
  %v282 = vadd.f32 %v233, %v262
  %v283 = vadd.f32 %v234, %v272
  %v284 = vadd.f32 %v235, %v273
  %v285 = vadd.f32 %v236, %v268
  %v286 = vld [vmem:[#allocation2 + $0x8] sm:$0xff]
  %v287 = vld [vmem:[#allocation2 + $0x10] sm:$0xff]
  %v288 = vld [vmem:[#allocation2 + $0x18] sm:$0xff]
  %v289 = vld [vmem:[#allocation2 + $0x28] sm:$0xff]
  %v290 = vld [vmem:[#allocation2 + $0x30] sm:$0xff]
  %v291 = vld [vmem:[#allocation2 + $0x38] sm:$0xff]
  %292 = vset.pattern.permute.xlu0 6
  %293 = vperm.xlu0 %292, %v205
  %v294 = vpop.permute.xlu0 %293
  %296 = vset.pattern.permute.xlu0 6
  %297 = vperm.xlu0 %296, %v206
  %v298 = vpop.permute.xlu0 %297
  %v300 = vmul.f32 %v286, %v294
  %v301 = vmul.f32 %v287, %v294
  %v302 = vmul.f32 %v288, %v294
  %v303 = vmul.f32 %v289, %v298
  %v304 = vmul.f32 %v290, %v298
  %v305 = vmul.f32 %v291, %v298
  %312 = vrot.lane.b32.xlu0 %v300, 96
  %v313 = vpop.permute.xlu0 %312
  %314 = vrot.lane.b32.xlu0 %v301, 96
  %v315 = vpop.permute.xlu0 %314
  %316 = vrot.lane.b32.xlu0 %v302, 96
  %v317 = vpop.permute.xlu0 %316
  %318 = vrot.lane.b32.xlu0 %v303, 96
  %v319 = vpop.permute.xlu0 %318
  %320 = vrot.lane.b32.xlu0 %v304, 96
  %v321 = vpop.permute.xlu0 %320
  %322 = vrot.lane.b32.xlu0 %v305, 96
  %v323 = vpop.permute.xlu0 %322
  %vm324 = vcmask 785408
  %v325 = vsel %vm324, %v313, %v315
  %v326 = vsel %vm324, %v315, %v317
  %v327 = vsel %vm324, %v319, %v321
  %v328 = vsel %vm324, %v321, %v323
  %v335 = vadd.f32 %v280, %v313
  %v336 = vadd.f32 %v281, %v325
  %v337 = vadd.f32 %v282, %v326
  %v338 = vadd.f32 %v283, %v319
  %v339 = vadd.f32 %v284, %v327
  %v340 = vadd.f32 %v285, %v328
  %v341 = vsel %vm163, 1, 0
  %v342 = vsel %vm164, 1, 0
  %vm343 = vcmp.eq.s32.totalorder %v341, 1
  %vm344 = vcmp.eq.s32.totalorder %v342, 1
  %351 = vrot.lane.b32.xlu0 %v335, 17
  %v352 = vpop.permute.xlu0 %351
  %353 = vrot.lane.b32.xlu0 %v336, 17
  %v354 = vpop.permute.xlu0 %353
  %355 = vrot.lane.b32.xlu0 %v337, 17
  %v356 = vpop.permute.xlu0 %355
  %357 = vrot.lane.b32.xlu0 %v338, 17
  %v358 = vpop.permute.xlu0 %357
  %359 = vrot.lane.b32.xlu0 %v339, 17
  %v360 = vpop.permute.xlu0 %359
  %361 = vrot.lane.b32.xlu0 %v340, 17
  %v362 = vpop.permute.xlu0 %361
  %vm363 = vcmask 138240
  %v364 = vsel %vm363, %v352, %v354
  %v365 = vsel %vm363, %v354, %v356
  %v366 = vsel %vm363, %v358, %v360
  %v367 = vsel %vm363, %v360, %v362
  %v372 = vsel %vm343, %v364, 0.0
  %v373 = vsel %vm344, %v365, 0.0
  %v374 = vsel %vm343, %v366, 0.0
  %v375 = vsel %vm344, %v367, 0.0
  %v376 = vadd.f32 %v372, 0.0
  %v377 = vadd.f32 %v373, 0.0
  %v378 = vadd.f32 %v374, 0.0
  %v379 = vadd.f32 %v375, 0.0
  %380 = vset.pattern.permute.xlu0 1
  %381 = vperm.xlu0 %380, %v205
  %v382 = vpop.permute.xlu0 %381
  %384 = vset.pattern.permute.xlu0 1
  %385 = vperm.xlu0 %384, %v206
  %v386 = vpop.permute.xlu0 %385
  %v388 = vmul.f32 %v209, %v382
  %v389 = vmul.f32 %v210, %v382
  %v390 = vmul.f32 %v211, %v382
  %v391 = vmul.f32 %v212, %v386
  %v392 = vmul.f32 %v213, %v386
  %v393 = vmul.f32 %v214, %v386
  %v394 = vadd.f32 %v388, 0.0
  %v395 = vadd.f32 %v389, 0.0
  %v396 = vadd.f32 %v390, 0.0
  %v397 = vadd.f32 %v391, 0.0
  %v398 = vadd.f32 %v392, 0.0
  %v399 = vadd.f32 %v393, 0.0
  %400 = vset.pattern.permute.xlu0 4
  %401 = vperm.xlu0 %400, %v205
  %v402 = vpop.permute.xlu0 %401
  %404 = vset.pattern.permute.xlu0 4
  %405 = vperm.xlu0 %404, %v206
  %v406 = vpop.permute.xlu0 %405
  %v408 = vmul.f32 %v210, %v402
  %v409 = vmul.f32 %v211, %v402
  %v410 = vmul.f32 %v213, %v406
  %v411 = vmul.f32 %v214, %v406
  %416 = vrot.lane.b32.xlu0 %v408, 112
  %v417 = vpop.permute.xlu0 %416
  %418 = vrot.lane.b32.xlu0 %v409, 112
  %v419 = vpop.permute.xlu0 %418
  %420 = vrot.lane.b32.xlu0 %v410, 112
  %v421 = vpop.permute.xlu0 %420
  %422 = vrot.lane.b32.xlu0 %v411, 112
  %v423 = vpop.permute.xlu0 %422
  %v424 = vsel %vm269, %v417, %v419
  %v425 = vsel %vm269, %v421, %v423
  %v432 = vadd.f32 %v394, %v417
  %v433 = vadd.f32 %v395, %v424
  %v434 = vadd.f32 %v396, %v419
  %v435 = vadd.f32 %v397, %v421
  %v436 = vadd.f32 %v398, %v425
  %v437 = vadd.f32 %v399, %v423
  %438 = vset.pattern.permute.xlu0 7
  %439 = vperm.xlu0 %438, %v205
  %v440 = vpop.permute.xlu0 %439
  %442 = vset.pattern.permute.xlu0 7
  %443 = vperm.xlu0 %442, %v206
  %v444 = vpop.permute.xlu0 %443
  %v446 = vmul.f32 %v286, %v440
  %v447 = vmul.f32 %v287, %v440
  %v448 = vmul.f32 %v288, %v440
  %v449 = vmul.f32 %v289, %v444
  %v450 = vmul.f32 %v290, %v444
  %v451 = vmul.f32 %v291, %v444
  %458 = vrot.lane.b32.xlu0 %v446, 96
  %v459 = vpop.permute.xlu0 %458
  %460 = vrot.lane.b32.xlu0 %v447, 96
  %v461 = vpop.permute.xlu0 %460
  %462 = vrot.lane.b32.xlu0 %v448, 96
  %v463 = vpop.permute.xlu0 %462
  %464 = vrot.lane.b32.xlu0 %v449, 96
  %v465 = vpop.permute.xlu0 %464
  %466 = vrot.lane.b32.xlu0 %v450, 96
  %v467 = vpop.permute.xlu0 %466
  %468 = vrot.lane.b32.xlu0 %v451, 96
  %v469 = vpop.permute.xlu0 %468
  %v470 = vsel %vm324, %v459, %v461
  %v471 = vsel %vm324, %v461, %v463
  %v472 = vsel %vm324, %v465, %v467
  %v473 = vsel %vm324, %v467, %v469
  %v480 = vadd.f32 %v432, %v459
  %v481 = vadd.f32 %v433, %v470
  %v482 = vadd.f32 %v434, %v471
  %v483 = vadd.f32 %v435, %v465
  %v484 = vadd.f32 %v436, %v472
  %v485 = vadd.f32 %v437, %v473
  %492 = vrot.lane.b32.xlu0 %v480, 16
  %v493 = vpop.permute.xlu0 %492
  %494 = vrot.lane.b32.xlu0 %v481, 16
  %v495 = vpop.permute.xlu0 %494
  %496 = vrot.lane.b32.xlu0 %v482, 16
  %v497 = vpop.permute.xlu0 %496
  %498 = vrot.lane.b32.xlu0 %v483, 16
  %v499 = vpop.permute.xlu0 %498
  %500 = vrot.lane.b32.xlu0 %v484, 16
  %v501 = vpop.permute.xlu0 %500
  %502 = vrot.lane.b32.xlu0 %v485, 16
  %v503 = vpop.permute.xlu0 %502
  %v504 = vsel %vm38, %v493, %v495
  %v505 = vsel %vm38, %v495, %v497
  %v506 = vsel %vm38, %v499, %v501
  %v507 = vsel %vm38, %v501, %v503
  %v512 = vadd.f32 %v376, %v504
  %v513 = vadd.f32 %v377, %v505
  %v514 = vadd.f32 %v378, %v506
  %v515 = vadd.f32 %v379, %v507
  %516 = vset.pattern.permute.xlu0 2
  %517 = vperm.xlu0 %516, %v205
  %v518 = vpop.permute.xlu0 %517
  %520 = vset.pattern.permute.xlu0 2
  %521 = vperm.xlu0 %520, %v206
  %v522 = vpop.permute.xlu0 %521
  %v524 = vmul.f32 %v209, %v518
  %v525 = vmul.f32 %v210, %v518
  %v526 = vmul.f32 %v211, %v518
  %v527 = vmul.f32 %v212, %v522
  %v528 = vmul.f32 %v213, %v522
  %v529 = vmul.f32 %v214, %v522
  %v530 = vadd.f32 %v524, 0.0
  %v531 = vadd.f32 %v525, 0.0
  %v532 = vadd.f32 %v526, 0.0
  %v533 = vadd.f32 %v527, 0.0
  %v534 = vadd.f32 %v528, 0.0
  %v535 = vadd.f32 %v529, 0.0
  %536 = vset.pattern.permute.xlu0 5
  %537 = vperm.xlu0 %536, %v205
  %v538 = vpop.permute.xlu0 %537
  %540 = vset.pattern.permute.xlu0 5
  %541 = vperm.xlu0 %540, %v206
  %v542 = vpop.permute.xlu0 %541
  %v544 = vmul.f32 %v286, %v538
  %v545 = vmul.f32 %v287, %v538
  %v546 = vmul.f32 %v288, %v538
  %v547 = vmul.f32 %v289, %v542
  %v548 = vmul.f32 %v290, %v542
  %v549 = vmul.f32 %v291, %v542
  %556 = vrot.lane.b32.xlu0 %v544, 112
  %v557 = vpop.permute.xlu0 %556
  %558 = vrot.lane.b32.xlu0 %v545, 112
  %v559 = vpop.permute.xlu0 %558
  %560 = vrot.lane.b32.xlu0 %v546, 112
  %v561 = vpop.permute.xlu0 %560
  %562 = vrot.lane.b32.xlu0 %v547, 112
  %v563 = vpop.permute.xlu0 %562
  %564 = vrot.lane.b32.xlu0 %v548, 112
  %v565 = vpop.permute.xlu0 %564
  %566 = vrot.lane.b32.xlu0 %v549, 112
  %v567 = vpop.permute.xlu0 %566
  %v568 = vsel %vm269, %v557, %v559
  %v569 = vsel %vm269, %v559, %v561
  %v570 = vsel %vm269, %v563, %v565
  %v571 = vsel %vm269, %v565, %v567
  %v578 = vadd.f32 %v530, %v557
  %v579 = vadd.f32 %v531, %v568
  %v580 = vadd.f32 %v532, %v569
  %v581 = vadd.f32 %v533, %v563
  %v582 = vadd.f32 %v534, %v570
  %v583 = vadd.f32 %v535, %v571
  %584 = vset.pattern.permute.xlu0 8
  %585 = vperm.xlu0 %584, %v205
  %v586 = vpop.permute.xlu0 %585
  %588 = vset.pattern.permute.xlu0 8
  %589 = vperm.xlu0 %588, %v206
  %v590 = vpop.permute.xlu0 %589
  %v592 = vmul.f32 %v286, %v586
  %v593 = vmul.f32 %v287, %v586
  %v594 = vmul.f32 %v288, %v586
  %v595 = vmul.f32 %v289, %v590
  %v596 = vmul.f32 %v290, %v590
  %v597 = vmul.f32 %v291, %v590
  %604 = vrot.lane.b32.xlu0 %v592, 96
  %v605 = vpop.permute.xlu0 %604
  %606 = vrot.lane.b32.xlu0 %v593, 96
  %v607 = vpop.permute.xlu0 %606
  %608 = vrot.lane.b32.xlu0 %v594, 96
  %v609 = vpop.permute.xlu0 %608
  %610 = vrot.lane.b32.xlu0 %v595, 96
  %v611 = vpop.permute.xlu0 %610
  %612 = vrot.lane.b32.xlu0 %v596, 96
  %v613 = vpop.permute.xlu0 %612
  %614 = vrot.lane.b32.xlu0 %v597, 96
  %v615 = vpop.permute.xlu0 %614
  %v616 = vsel %vm324, %v605, %v607
  %v617 = vsel %vm324, %v607, %v609
  %v618 = vsel %vm324, %v611, %v613
  %v619 = vsel %vm324, %v613, %v615
  %v626 = vadd.f32 %v578, %v605
  %v627 = vadd.f32 %v579, %v616
  %v628 = vadd.f32 %v580, %v617
  %v629 = vadd.f32 %v581, %v611
  %v630 = vadd.f32 %v582, %v618
  %v631 = vadd.f32 %v583, %v619
  %v632 = vsel %vm171, 1, 0
  %v633 = vsel %vm172, 1, 0
  %vm634 = vcmp.eq.s32.totalorder %v632, 1
  %vm635 = vcmp.eq.s32.totalorder %v633, 1
  %642 = vrot.lane.b32.xlu0 %v626, 15
  %v643 = vpop.permute.xlu0 %642
  %644 = vrot.lane.b32.xlu0 %v627, 15
  %v645 = vpop.permute.xlu0 %644
  %646 = vrot.lane.b32.xlu0 %v628, 15
  %v647 = vpop.permute.xlu0 %646
  %648 = vrot.lane.b32.xlu0 %v629, 15
  %v649 = vpop.permute.xlu0 %648
  %650 = vrot.lane.b32.xlu0 %v630, 15
  %v651 = vpop.permute.xlu0 %650
  %652 = vrot.lane.b32.xlu0 %v631, 15
  %v653 = vpop.permute.xlu0 %652
  %vm654 = vcmask 121856
  %v655 = vsel %vm654, %v643, %v645
  %v656 = vsel %vm654, %v645, %v647
  %v657 = vsel %vm654, %v649, %v651
  %v658 = vsel %vm654, %v651, %v653
  %v663 = vsel %vm634, %v655, 0.0
  %v664 = vsel %vm635, %v656, 0.0
  %v665 = vsel %vm634, %v657, 0.0
  %v666 = vsel %vm635, %v658, 0.0
  %v667 = vadd.f32 %v512, %v663
  %v668 = vadd.f32 %v513, %v664
  %v669 = vadd.f32 %v514, %v665
  %v670 = vadd.f32 %v515, %v666
  %672 = vset.pattern.permute.xlu0 0
  %673 = vperm.xlu0 %672, %v207
  %v674 = vpop.permute.xlu0 %673
  %677 = vset.pattern.permute.xlu0 0
  %678 = vperm.xlu0 %677, %v208
  %v679 = vpop.permute.xlu0 %678
  %v681 = vadd.f32 %v667, %v674
  %v682 = vadd.f32 %v668, %v674
  %v683 = vadd.f32 %v669, %v679
  %v684 = vadd.f32 %v670, %v679
  %v685 = vxor.u32 %v681, 2147483648
  %v686 = vxor.u32 %v682, 2147483648
  %v687 = vxor.u32 %v683, 2147483648
  %v688 = vxor.u32 %v684, 2147483648
  %v689 = vmul.f32 %v685, 1.442695
  %v690 = vpow.pop %v689
  %v691 = vmul.f32 %v686, 1.442695
  %v692 = vpow.pop %v691
  %v693 = vmul.f32 %v687, 1.442695
  %v694 = vpow.pop %v693
  %v695 = vmul.f32 %v688, 1.442695
  %v696 = vpow.pop %v695
  %v697 = vadd.f32 %v690, 1.0
  %v698 = vadd.f32 %v692, 1.0
  %v699 = vadd.f32 %v694, 1.0
  %v700 = vadd.f32 %v696, 1.0
  %v701 = vrcp.pop %v697
  %v702 = vmul.f32 1.0, %v701
  %v703 = vrcp.pop %v698
  %v704 = vmul.f32 1.0, %v703
  %v705 = vrcp.pop %v699
  %v706 = vmul.f32 1.0, %v705
  %v707 = vrcp.pop %v700
  %v708 = vmul.f32 1.0, %v707
  %v709 = vmul.f32 %v681, %v702
  %v710 = vmul.f32 %v682, %v704
  %v711 = vmul.f32 %v683, %v706
  %v712 = vmul.f32 %v684, %v708
  %v713 = vadd.f32 %v709, 0.0
  %v714 = vadd.f32 %v710, 0.0
  %v715 = vadd.f32 %v711, 0.0
  %v716 = vadd.f32 %v712, 0.0
  %717 = vrot.lane.b32.xlu0 %v245, 80
  %v718 = vpop.permute.xlu0 %717
  %719 = vrot.lane.b32.xlu0 %v246, 80
  %v720 = vpop.permute.xlu0 %719
  %721 = vrot.lane.b32.xlu0 %v247, 80
  %v722 = vpop.permute.xlu0 %721
  %723 = vrot.lane.b32.xlu0 %v248, 80
  %v724 = vpop.permute.xlu0 %723
  %725 = vrot.lane.b32.xlu0 %v249, 80
  %v726 = vpop.permute.xlu0 %725
  %727 = vrot.lane.b32.xlu0 %v250, 80
  %v728 = vpop.permute.xlu0 %727
  %vm729 = vcmask 654336
  %v730 = vsel %vm729, %v718, %v720
  %v731 = vsel %vm729, %v720, %v722
  %v732 = vsel %vm729, %v724, %v726
  %v733 = vsel %vm729, %v726, %v728
  %v740 = vadd.f32 %v231, %v730
  %v741 = vadd.f32 %v232, %v731
  %v742 = vadd.f32 %v233, %v722
  %v743 = vadd.f32 %v234, %v732
  %v744 = vadd.f32 %v235, %v733
  %v745 = vadd.f32 %v236, %v728
  %746 = vrot.lane.b32.xlu0 %v300, 32
  %v747 = vpop.permute.xlu0 %746
  %748 = vrot.lane.b32.xlu0 %v301, 32
  %v749 = vpop.permute.xlu0 %748
  %750 = vrot.lane.b32.xlu0 %v302, 32
  %v751 = vpop.permute.xlu0 %750
  %752 = vrot.lane.b32.xlu0 %v303, 32
  %v753 = vpop.permute.xlu0 %752
  %754 = vrot.lane.b32.xlu0 %v304, 32
  %v755 = vpop.permute.xlu0 %754
  %756 = vrot.lane.b32.xlu0 %v305, 32
  %v757 = vpop.permute.xlu0 %756
  %vm758 = vcmask 261120
  %v759 = vsel %vm758, %v747, %v749
  %v760 = vsel %vm758, %v749, %v751
  %v761 = vsel %vm758, %v753, %v755
  %v762 = vsel %vm758, %v755, %v757
  %v769 = vadd.f32 %v740, %v747
  %v770 = vadd.f32 %v741, %v759
  %v771 = vadd.f32 %v742, %v760
  %v772 = vadd.f32 %v743, %v753
  %v773 = vadd.f32 %v744, %v761
  %v774 = vadd.f32 %v745, %v762
  %v775 = vsel %vm179, 1, 0
  %v776 = vsel %vm180, 1, 0
  %vm777 = vcmp.eq.s32.totalorder %v775, 1
  %vm778 = vcmp.eq.s32.totalorder %v776, 1
  %785 = vrot.lane.b32.xlu0 %v769, 51
  %v786 = vpop.permute.xlu0 %785
  %787 = vrot.lane.b32.xlu0 %v770, 51
  %v788 = vpop.permute.xlu0 %787
  %789 = vrot.lane.b32.xlu0 %v771, 51
  %v790 = vpop.permute.xlu0 %789
  %791 = vrot.lane.b32.xlu0 %v772, 51
  %v792 = vpop.permute.xlu0 %791
  %793 = vrot.lane.b32.xlu0 %v773, 51
  %v794 = vpop.permute.xlu0 %793
  %795 = vrot.lane.b32.xlu0 %v774, 51
  %v796 = vpop.permute.xlu0 %795
  %vm797 = vcmask 416768
  %v798 = vsel %vm797, %v786, %v788
  %v799 = vsel %vm797, %v788, %v790
  %v800 = vsel %vm797, %v792, %v794
  %v801 = vsel %vm797, %v794, %v796
  %v806 = vsel %vm777, %v798, 0.0
  %v807 = vsel %vm778, %v799, 0.0
  %v808 = vsel %vm777, %v800, 0.0
  %v809 = vsel %vm778, %v801, 0.0
  %v810 = vadd.f32 %v806, 0.0
  %v811 = vadd.f32 %v807, 0.0
  %v812 = vadd.f32 %v808, 0.0
  %v813 = vadd.f32 %v809, 0.0
  %814 = vrot.lane.b32.xlu0 %v408, 80
  %v815 = vpop.permute.xlu0 %814
  %816 = vrot.lane.b32.xlu0 %v409, 80
  %v817 = vpop.permute.xlu0 %816
  %818 = vrot.lane.b32.xlu0 %v410, 80
  %v819 = vpop.permute.xlu0 %818
  %820 = vrot.lane.b32.xlu0 %v411, 80
  %v821 = vpop.permute.xlu0 %820
  %v822 = vsel %vm729, %v815, %v817
  %v823 = vsel %vm729, %v819, %v821
  %v830 = vadd.f32 %v394, %v815
  %v831 = vadd.f32 %v395, %v822
  %v832 = vadd.f32 %v396, %v817
  %v833 = vadd.f32 %v397, %v819
  %v834 = vadd.f32 %v398, %v823
  %v835 = vadd.f32 %v399, %v821
  %836 = vrot.lane.b32.xlu0 %v446, 32
  %v837 = vpop.permute.xlu0 %836
  %838 = vrot.lane.b32.xlu0 %v447, 32
  %v839 = vpop.permute.xlu0 %838
  %840 = vrot.lane.b32.xlu0 %v448, 32
  %v841 = vpop.permute.xlu0 %840
  %842 = vrot.lane.b32.xlu0 %v449, 32
  %v843 = vpop.permute.xlu0 %842
  %844 = vrot.lane.b32.xlu0 %v450, 32
  %v845 = vpop.permute.xlu0 %844
  %846 = vrot.lane.b32.xlu0 %v451, 32
  %v847 = vpop.permute.xlu0 %846
  %v848 = vsel %vm758, %v837, %v839
  %v849 = vsel %vm758, %v839, %v841
  %v850 = vsel %vm758, %v843, %v845
  %v851 = vsel %vm758, %v845, %v847
  %v858 = vadd.f32 %v830, %v837
  %v859 = vadd.f32 %v831, %v848
  %v860 = vadd.f32 %v832, %v849
  %v861 = vadd.f32 %v833, %v843
  %v862 = vadd.f32 %v834, %v850
  %v863 = vadd.f32 %v835, %v851
  %870 = vrot.lane.b32.xlu0 %v858, 48
  %v871 = vpop.permute.xlu0 %870
  %872 = vrot.lane.b32.xlu0 %v859, 48
  %v873 = vpop.permute.xlu0 %872
  %874 = vrot.lane.b32.xlu0 %v860, 48
  %v875 = vpop.permute.xlu0 %874
  %876 = vrot.lane.b32.xlu0 %v861, 48
  %v877 = vpop.permute.xlu0 %876
  %878 = vrot.lane.b32.xlu0 %v862, 48
  %v879 = vpop.permute.xlu0 %878
  %880 = vrot.lane.b32.xlu0 %v863, 48
  %v881 = vpop.permute.xlu0 %880
  %vm882 = vcmask 392192
  %v883 = vsel %vm882, %v871, %v873
  %v884 = vsel %vm882, %v873, %v875
  %v885 = vsel %vm882, %v877, %v879
  %v886 = vsel %vm882, %v879, %v881
  %v891 = vadd.f32 %v810, %v883
  %v892 = vadd.f32 %v811, %v884
  %v893 = vadd.f32 %v812, %v885
  %v894 = vadd.f32 %v813, %v886
  %895 = vrot.lane.b32.xlu0 %v544, 80
  %v896 = vpop.permute.xlu0 %895
  %897 = vrot.lane.b32.xlu0 %v545, 80
  %v898 = vpop.permute.xlu0 %897
  %899 = vrot.lane.b32.xlu0 %v546, 80
  %v900 = vpop.permute.xlu0 %899
  %901 = vrot.lane.b32.xlu0 %v547, 80
  %v902 = vpop.permute.xlu0 %901
  %903 = vrot.lane.b32.xlu0 %v548, 80
  %v904 = vpop.permute.xlu0 %903
  %905 = vrot.lane.b32.xlu0 %v549, 80
  %v906 = vpop.permute.xlu0 %905
  %v907 = vsel %vm729, %v896, %v898
  %v908 = vsel %vm729, %v898, %v900
  %v909 = vsel %vm729, %v902, %v904
  %v910 = vsel %vm729, %v904, %v906
  %v917 = vadd.f32 %v530, %v896
  %v918 = vadd.f32 %v531, %v907
  %v919 = vadd.f32 %v532, %v908
  %v920 = vadd.f32 %v533, %v902
  %v921 = vadd.f32 %v534, %v909
  %v922 = vadd.f32 %v535, %v910
  %923 = vrot.lane.b32.xlu0 %v592, 32
  %v924 = vpop.permute.xlu0 %923
  %925 = vrot.lane.b32.xlu0 %v593, 32
  %v926 = vpop.permute.xlu0 %925
  %927 = vrot.lane.b32.xlu0 %v594, 32
  %v928 = vpop.permute.xlu0 %927
  %929 = vrot.lane.b32.xlu0 %v595, 32
  %v930 = vpop.permute.xlu0 %929
  %931 = vrot.lane.b32.xlu0 %v596, 32
  %v932 = vpop.permute.xlu0 %931
  %933 = vrot.lane.b32.xlu0 %v597, 32
  %v934 = vpop.permute.xlu0 %933
  %v935 = vsel %vm758, %v924, %v926
  %v936 = vsel %vm758, %v926, %v928
  %v937 = vsel %vm758, %v930, %v932
  %v938 = vsel %vm758, %v932, %v934
  %v945 = vadd.f32 %v917, %v924
  %v946 = vadd.f32 %v918, %v935
  %v947 = vadd.f32 %v919, %v936
  %v948 = vadd.f32 %v920, %v930
  %v949 = vadd.f32 %v921, %v937
  %v950 = vadd.f32 %v922, %v938
  %v951 = vsel %vm187, 1, 0
  %v952 = vsel %vm188, 1, 0
  %vm953 = vcmp.eq.s32.totalorder %v951, 1
  %vm954 = vcmp.eq.s32.totalorder %v952, 1
  %961 = vrot.lane.b32.xlu0 %v945, 45
  %v962 = vpop.permute.xlu0 %961
  %963 = vrot.lane.b32.xlu0 %v946, 45
  %v964 = vpop.permute.xlu0 %963
  %965 = vrot.lane.b32.xlu0 %v947, 45
  %v966 = vpop.permute.xlu0 %965
  %967 = vrot.lane.b32.xlu0 %v948, 45
  %v968 = vpop.permute.xlu0 %967
  %969 = vrot.lane.b32.xlu0 %v949, 45
  %v970 = vpop.permute.xlu0 %969
  %971 = vrot.lane.b32.xlu0 %v950, 45
  %v972 = vpop.permute.xlu0 %971
  %vm973 = vcmask 367616
  %v974 = vsel %vm973, %v962, %v964
  %v975 = vsel %vm973, %v964, %v966
  %v976 = vsel %vm973, %v968, %v970
  %v977 = vsel %vm973, %v970, %v972
  %v982 = vsel %vm953, %v974, 0.0
  %v983 = vsel %vm954, %v975, 0.0
  %v984 = vsel %vm953, %v976, 0.0
  %v985 = vsel %vm954, %v977, 0.0
  %v986 = vadd.f32 %v891, %v982
  %v987 = vadd.f32 %v892, %v983
  %v988 = vadd.f32 %v893, %v984
  %v989 = vadd.f32 %v894, %v985
  %v990 = vadd.f32 %v986, %v674
  %v991 = vadd.f32 %v987, %v674
  %v992 = vadd.f32 %v988, %v679
  %v993 = vadd.f32 %v989, %v679
  %v994 = vxor.u32 %v990, 2147483648
  %v995 = vxor.u32 %v991, 2147483648
  %v996 = vxor.u32 %v992, 2147483648
  %v997 = vxor.u32 %v993, 2147483648
  %v998 = vmul.f32 %v994, 1.442695
  %v999 = vpow.pop %v998
  %v1000 = vmul.f32 %v995, 1.442695
  %v1001 = vpow.pop %v1000
  %v1002 = vmul.f32 %v996, 1.442695
  %v1003 = vpow.pop %v1002
  %v1004 = vmul.f32 %v997, 1.442695
  %v1005 = vpow.pop %v1004
  %v1006 = vadd.f32 %v999, 1.0
  %v1007 = vadd.f32 %v1001, 1.0
  %v1008 = vadd.f32 %v1003, 1.0
  %v1009 = vadd.f32 %v1005, 1.0
  %v1010 = vrcp.pop %v1006
  %v1011 = vmul.f32 1.0, %v1010
  %v1012 = vrcp.pop %v1007
  %v1013 = vmul.f32 1.0, %v1012
  %v1014 = vrcp.pop %v1008
  %v1015 = vmul.f32 1.0, %v1014
  %v1016 = vrcp.pop %v1009
  %v1017 = vmul.f32 1.0, %v1016
  %v1018 = vmul.f32 %v990, %v1011
  %v1019 = vmul.f32 %v991, %v1013
  %v1020 = vmul.f32 %v992, %v1015
  %v1021 = vmul.f32 %v993, %v1017
  %v1022 = vadd.f32 %v713, %v1018
  %v1023 = vadd.f32 %v714, %v1019
  %v1024 = vadd.f32 %v715, %v1020
  %v1025 = vadd.f32 %v716, %v1021
  %1026 = vrot.lane.b32.xlu0 %v245, 48
  %v1027 = vpop.permute.xlu0 %1026
  %1028 = vrot.lane.b32.xlu0 %v246, 48
  %v1029 = vpop.permute.xlu0 %1028
  %1030 = vrot.lane.b32.xlu0 %v247, 48
  %v1031 = vpop.permute.xlu0 %1030
  %1032 = vrot.lane.b32.xlu0 %v248, 48
  %v1033 = vpop.permute.xlu0 %1032
  %1034 = vrot.lane.b32.xlu0 %v249, 48
  %v1035 = vpop.permute.xlu0 %1034
  %1036 = vrot.lane.b32.xlu0 %v250, 48
  %v1037 = vpop.permute.xlu0 %1036
  %v1038 = vsel %vm882, %v1027, %v1029
  %v1039 = vsel %vm882, %v1029, %v1031
  %v1040 = vsel %vm882, %v1033, %v1035
  %v1041 = vsel %vm882, %v1035, %v1037
  %v1048 = vadd.f32 %v231, %v1038
  %v1049 = vadd.f32 %v232, %v1039
  %v1050 = vadd.f32 %v233, %v1031
  %v1051 = vadd.f32 %v234, %v1040
  %v1052 = vadd.f32 %v235, %v1041
  %v1053 = vadd.f32 %v236, %v1037
  %v1056 = vadd.f32 %v1048, %v325
  %v1057 = vadd.f32 %v1049, %v326
  %v1058 = vadd.f32 %v1050, %v317
  %v1059 = vadd.f32 %v1051, %v327
  %v1060 = vadd.f32 %v1052, %v328
  %v1061 = vadd.f32 %v1053, %v323
  %v1062 = vsel %vm195, 1, 0
  %v1063 = vsel %vm196, 1, 0
  %vm1064 = vcmp.eq.s32.totalorder %v1062, 1
  %vm1065 = vcmp.eq.s32.totalorder %v1063, 1
  %1072 = vrot.lane.b32.xlu0 %v1056, 85
  %v1073 = vpop.permute.xlu0 %1072
  %1074 = vrot.lane.b32.xlu0 %v1057, 85
  %v1075 = vpop.permute.xlu0 %1074
  %1076 = vrot.lane.b32.xlu0 %v1058, 85
  %v1077 = vpop.permute.xlu0 %1076
  %1078 = vrot.lane.b32.xlu0 %v1059, 85
  %v1079 = vpop.permute.xlu0 %1078
  %1080 = vrot.lane.b32.xlu0 %v1060, 85
  %v1081 = vpop.permute.xlu0 %1080
  %1082 = vrot.lane.b32.xlu0 %v1061, 85
  %v1083 = vpop.permute.xlu0 %1082
  %vm1084 = vcmask 695296
  %v1085 = vsel %vm1084, %v1073, %v1075
  %v1086 = vsel %vm1084, %v1075, %v1077
  %v1087 = vsel %vm1084, %v1079, %v1081
  %v1088 = vsel %vm1084, %v1081, %v1083
  %v1093 = vsel %vm1064, %v1085, 0.0
  %v1094 = vsel %vm1065, %v1086, 0.0
  %v1095 = vsel %vm1064, %v1087, 0.0
  %v1096 = vsel %vm1065, %v1088, 0.0
  %v1097 = vadd.f32 %v1093, 0.0
  %v1098 = vadd.f32 %v1094, 0.0
  %v1099 = vadd.f32 %v1095, 0.0
  %v1100 = vadd.f32 %v1096, 0.0
  %1101 = vrot.lane.b32.xlu0 %v408, 48
  %v1102 = vpop.permute.xlu0 %1101
  %1103 = vrot.lane.b32.xlu0 %v409, 48
  %v1104 = vpop.permute.xlu0 %1103
  %1105 = vrot.lane.b32.xlu0 %v410, 48
  %v1106 = vpop.permute.xlu0 %1105
  %1107 = vrot.lane.b32.xlu0 %v411, 48
  %v1108 = vpop.permute.xlu0 %1107
  %v1109 = vsel %vm882, %v1102, %v1104
  %v1110 = vsel %vm882, %v1106, %v1108
  %v1117 = vadd.f32 %v394, %v1102
  %v1118 = vadd.f32 %v395, %v1109
  %v1119 = vadd.f32 %v396, %v1104
  %v1120 = vadd.f32 %v397, %v1106
  %v1121 = vadd.f32 %v398, %v1110
  %v1122 = vadd.f32 %v399, %v1108
  %v1125 = vadd.f32 %v1117, %v470
  %v1126 = vadd.f32 %v1118, %v471
  %v1127 = vadd.f32 %v1119, %v463
  %v1128 = vadd.f32 %v1120, %v472
  %v1129 = vadd.f32 %v1121, %v473
  %v1130 = vadd.f32 %v1122, %v469
  %1137 = vrot.lane.b32.xlu0 %v1125, 80
  %v1138 = vpop.permute.xlu0 %1137
  %1139 = vrot.lane.b32.xlu0 %v1126, 80
  %v1140 = vpop.permute.xlu0 %1139
  %1141 = vrot.lane.b32.xlu0 %v1127, 80
  %v1142 = vpop.permute.xlu0 %1141
  %1143 = vrot.lane.b32.xlu0 %v1128, 80
  %v1144 = vpop.permute.xlu0 %1143
  %1145 = vrot.lane.b32.xlu0 %v1129, 80
  %v1146 = vpop.permute.xlu0 %1145
  %1147 = vrot.lane.b32.xlu0 %v1130, 80
  %v1148 = vpop.permute.xlu0 %1147
  %v1149 = vsel %vm729, %v1138, %v1140
  %v1150 = vsel %vm729, %v1140, %v1142
  %v1151 = vsel %vm729, %v1144, %v1146
  %v1152 = vsel %vm729, %v1146, %v1148
  %v1157 = vadd.f32 %v1097, %v1149
  %v1158 = vadd.f32 %v1098, %v1150
  %v1159 = vadd.f32 %v1099, %v1151
  %v1160 = vadd.f32 %v1100, %v1152
  %1161 = vrot.lane.b32.xlu0 %v544, 48
  %v1162 = vpop.permute.xlu0 %1161
  %1163 = vrot.lane.b32.xlu0 %v545, 48
  %v1164 = vpop.permute.xlu0 %1163
  %1165 = vrot.lane.b32.xlu0 %v546, 48
  %v1166 = vpop.permute.xlu0 %1165
  %1167 = vrot.lane.b32.xlu0 %v547, 48
  %v1168 = vpop.permute.xlu0 %1167
  %1169 = vrot.lane.b32.xlu0 %v548, 48
  %v1170 = vpop.permute.xlu0 %1169
  %1171 = vrot.lane.b32.xlu0 %v549, 48
  %v1172 = vpop.permute.xlu0 %1171
  %v1173 = vsel %vm882, %v1162, %v1164
  %v1174 = vsel %vm882, %v1164, %v1166
  %v1175 = vsel %vm882, %v1168, %v1170
  %v1176 = vsel %vm882, %v1170, %v1172
  %v1183 = vadd.f32 %v530, %v1162
  %v1184 = vadd.f32 %v531, %v1173
  %v1185 = vadd.f32 %v532, %v1174
  %v1186 = vadd.f32 %v533, %v1168
  %v1187 = vadd.f32 %v534, %v1175
  %v1188 = vadd.f32 %v535, %v1176
  %v1191 = vadd.f32 %v1183, %v616
  %v1192 = vadd.f32 %v1184, %v617
  %v1193 = vadd.f32 %v1185, %v609
  %v1194 = vadd.f32 %v1186, %v618
  %v1195 = vadd.f32 %v1187, %v619
  %v1196 = vadd.f32 %v1188, %v615
  %v1197 = vsel %vm203, 1, 0
  %v1198 = vsel %vm204, 1, 0
  %vm1199 = vcmp.eq.s32.totalorder %v1197, 1
  %vm1200 = vcmp.eq.s32.totalorder %v1198, 1
  %1207 = vrot.lane.b32.xlu0 %v1191, 75
  %v1208 = vpop.permute.xlu0 %1207
  %1209 = vrot.lane.b32.xlu0 %v1192, 75
  %v1210 = vpop.permute.xlu0 %1209
  %1211 = vrot.lane.b32.xlu0 %v1193, 75
  %v1212 = vpop.permute.xlu0 %1211
  %1213 = vrot.lane.b32.xlu0 %v1194, 75
  %v1214 = vpop.permute.xlu0 %1213
  %1215 = vrot.lane.b32.xlu0 %v1195, 75
  %v1216 = vpop.permute.xlu0 %1215
  %1217 = vrot.lane.b32.xlu0 %v1196, 75
  %v1218 = vpop.permute.xlu0 %1217
  %vm1219 = vcmask 613376
  %v1220 = vsel %vm1219, %v1208, %v1210
  %v1221 = vsel %vm1219, %v1210, %v1212
  %v1222 = vsel %vm1219, %v1214, %v1216
  %v1223 = vsel %vm1219, %v1216, %v1218
  %v1228 = vsel %vm1199, %v1220, 0.0
  %v1229 = vsel %vm1200, %v1221, 0.0
  %v1230 = vsel %vm1199, %v1222, 0.0
  %v1231 = vsel %vm1200, %v1223, 0.0
  %v1232 = vadd.f32 %v1157, %v1228
  %v1233 = vadd.f32 %v1158, %v1229
  %v1234 = vadd.f32 %v1159, %v1230
  %v1235 = vadd.f32 %v1160, %v1231
  %v1236 = vadd.f32 %v1232, %v674
  %v1237 = vadd.f32 %v1233, %v674
  %v1238 = vadd.f32 %v1234, %v679
  %v1239 = vadd.f32 %v1235, %v679
  %v1240 = vxor.u32 %v1236, 2147483648
  %v1241 = vxor.u32 %v1237, 2147483648
  %v1242 = vxor.u32 %v1238, 2147483648
  %v1243 = vxor.u32 %v1239, 2147483648
  %v1244 = vmul.f32 %v1240, 1.442695
  %v1245 = vpow.pop %v1244
  %v1246 = vmul.f32 %v1241, 1.442695
  %v1247 = vpow.pop %v1246
  %v1248 = vmul.f32 %v1242, 1.442695
  %v1249 = vpow.pop %v1248
  %v1250 = vmul.f32 %v1243, 1.442695
  %v1251 = vpow.pop %v1250
  %v1252 = vadd.f32 %v1245, 1.0
  %v1253 = vadd.f32 %v1247, 1.0
  %v1254 = vadd.f32 %v1249, 1.0
  %v1255 = vadd.f32 %v1251, 1.0
  %v1256 = vrcp.pop %v1252
  %v1257 = vmul.f32 1.0, %v1256
  %v1258 = vrcp.pop %v1253
  %v1259 = vmul.f32 1.0, %v1258
  %v1260 = vrcp.pop %v1254
  %v1261 = vmul.f32 1.0, %v1260
  %v1262 = vrcp.pop %v1255
  %v1263 = vmul.f32 1.0, %v1262
  %v1264 = vmul.f32 %v1236, %v1257
  %v1265 = vmul.f32 %v1237, %v1259
  %v1266 = vmul.f32 %v1238, %v1261
  %v1267 = vmul.f32 %v1239, %v1263
  %v1268 = vadd.f32 %v1022, %v1264
  %v1269 = vadd.f32 %v1023, %v1265
  %v1270 = vadd.f32 %v1024, %v1266
  %v1271 = vadd.f32 %v1025, %v1267
  %1272 = vst [vmem:[%s5] sm:$0xff] %v1268
  %1273 = vst [vmem:[%s5 + $0x8] sm:$0xff] %v1269
  %1274 = vst [vmem:[%s5 + $0x10] sm:$0xff] %v1270
  %1275 = vst [vmem:[%s5 + $0x18] sm:$0xff] %v1271
  // Predicated region
  $region22: #{dsc_forward.1} parent=0 // pred_check
    _
  $region23: #{dsc_forward.1} parent=0 // pred_check_branch
    %1277 = sbr.rel (0) target = $region25
  $region24: #{dsc_forward.1} parent=0 // pred_region
    _
  $region25: #{dsc_forward.1} parent=0 // pred_fallthru
    _
  // Predicated region
  $region26: #{dsc_forward.1} parent=0 // pred_check
    _
  $region27: #{dsc_forward.1} parent=0 // pred_check_branch
    %1279 = sbr.rel (0) target = $region29
  $region28: #{dsc_forward.1} parent=0 // pred_region
    _
  $region29: #{dsc_forward.1} parent=0 // pred_fallthru
    _

</llo_original>
